<compile_context>
chip_gen: v7x
topology: tpu7x:2x2x1
jax: 0.10.0
libtpu: 0.0.40
codegen_flags: <defaults>
</compile_context>

<pallas_src>
import math
import functools

import jax
import jax.numpy as jnp
from jax.experimental import pallas as pl
from jax.experimental.pallas import tpu as pltpu

LN_EPS = 1e-5          # nn.LayerNorm default
NEG_MASK = -1e30       # large finite negative: -inf-equivalent but NaN-safe


def _layernorm(v, g, b):
    mean = jnp.mean(v, axis=-1, keepdims=True)
    var = jnp.mean((v - mean) ** 2, axis=-1, keepdims=True)
    return (v - mean) * jax.lax.rsqrt(var + LN_EPS) * g + b


def clip_layer_kernel(x_full_ref, x_tile_ref,
                      ln1_g_ref, ln1_b_ref,
                      wq_ref, wk_ref, wv_ref,
                      bq_ref, bk_ref, bv_ref,
                      wo_ref, bo_ref,
                      ln2_g_ref, ln2_b_ref,
                      w1_ref, b1_ref,
                      w2_ref, b2_ref,
                      o_ref,
                      q_scratch, k_scratch, v_scratch,
                      *, n_head, d_head, tq):
    S = x_full_ref.shape[1]
    qi = pl.program_id(1)

    # ---- Q/K/V for the whole sequence: once per batch element, head-major bf16 ----
    @pl.when(qi == 0)
    def _build_qkv():
        x_full = x_full_ref[0].astype(jnp.float32)                      # (S, E)
        h = _layernorm(x_full, ln1_g_ref[...], ln1_b_ref[...]).astype(jnp.bfloat16)
        # 1/sqrt(d_head) is already folded into wq / bq on the host.
        q2 = (jnp.dot(h, wq_ref[...], preferred_element_type=jnp.float32)
              + bq_ref[...]).astype(jnp.bfloat16)                       # (S, E)
        k2 = (jnp.dot(h, wk_ref[...], preferred_element_type=jnp.float32)
              + bk_ref[...]).astype(jnp.bfloat16)
        v2 = (jnp.dot(h, wv_ref[...], preferred_element_type=jnp.float32)
              + bv_ref[...]).astype(jnp.bfloat16)
        for hd in range(n_head):                                        # static head-major stores
            q_scratch[hd] = q2[:, hd * d_head:(hd + 1) * d_head]
            k_scratch[hd] = k2[:, hd * d_head:(hd + 1) * d_head]
            v_scratch[hd] = v2[:, hd * d_head:(hd + 1) * d_head]

    # ---- per query tile ----
    x_tile = x_tile_ref[0].astype(jnp.float32)                          # (tq, E) residual

    q_start = pl.multiple_of(qi * tq, tq)
    q_hm = q_scratch[:, pl.ds(q_start, tq), :]                          # (H, tq, Dh), pre-scaled

    # batched-over-heads attention (MXU, f32 accumulation)
    scores = jnp.einsum('hqd,hkd->hqk', q_hm, k_scratch[...],
                        preferred_element_type=jnp.float32)             # (H, tq, S)

    row = jax.lax.broadcasted_iota(jnp.int32, (tq, S), 0) + qi * tq     # global query position
    col = jax.lax.broadcasted_iota(jnp.int32, (tq, S), 1)
    scores = jnp.where((col > row)[None, :, :], NEG_MASK, scores)       # causal mask

    m = jnp.max(scores, axis=-1, keepdims=True)
    p = jnp.exp(scores - m)
    p = p * pl.reciprocal(jnp.sum(p, axis=-1, keepdims=True), approx=True)

    attn = jnp.einsum('hqk,hkd->hqd', p.astype(jnp.bfloat16), v_scratch[...],
                      preferred_element_type=jnp.float32)               # (H, tq, Dh)

    # output projection with head-major weights, summed over heads (no lane concat)
    o_heads = jnp.einsum('hqd,hde->hqe', attn.astype(jnp.bfloat16), wo_ref[...],
                         preferred_element_type=jnp.float32)            # (H, tq, E)
    x1 = jnp.sum(o_heads, axis=0) + bo_ref[...] + x_tile                # residual 1 (f32)

    # ---- MLP with QuickGELU ----
    h2 = _layernorm(x1, ln2_g_ref[...], ln2_b_ref[...]).astype(jnp.bfloat16)
    h3 = jnp.dot(h2, w1_ref[...], preferred_element_type=jnp.float32) + b1_ref[...]
    h3 = h3 * jax.nn.sigmoid(1.702 * h3)                                # QuickGELU (f32, EUP)
    h4 = jnp.dot(h3.astype(jnp.bfloat16), w2_ref[...],
                 preferred_element_type=jnp.float32) + b2_ref[...]
    o_ref[0] = (h4 + x1).astype(o_ref.dtype)                            # residual 2


def clip_layer(x, params, n_head, tq=None):
    """Pallas TPU forward of CLIPLayer.  `params` mirrors the PyTorch module:
    (ln1_g, ln1_b, w_in, b_in, w_out, b_out, ln2_g, ln2_b, w1, b1, w2, b2),
    linear weights pre-transposed to (in_features, out_features)."""
    (ln1_g, ln1_b, w_in, b_in, w_out, b_out,
     ln2_g, ln2_b, w1, b1, w2, b2) = params
    B, S, E = x.shape
    assert E % n_head == 0
    d_head = E // n_head

    if tq is None:                       # query-tile size along the sequence
        tq = 128 if (S % 128 == 0) else S
    assert S % tq == 0
    n_q = S // tq

    f32, bf16 = jnp.float32, jnp.bfloat16
    scale = 1.0 / math.sqrt(d_head)
    kparams = (
        ln1_g.astype(f32), ln1_b.astype(f32),
        (w_in[:, 0 * E:1 * E] * scale).astype(bf16),       # wq (E, E), 1/sqrt(d_head) folded in
        w_in[:, 1 * E:2 * E].astype(bf16),                  # wk
        w_in[:, 2 * E:3 * E].astype(bf16),                  # wv
        (b_in[:, 0 * E:1 * E] * scale).astype(f32),         # bq (1, E), scale folded in
        b_in[:, 1 * E:2 * E].astype(f32),                   # bk
        b_in[:, 2 * E:3 * E].astype(f32),                   # bv
        w_out.reshape(n_head, d_head, E).astype(bf16),      # head-major out-proj (H, Dh, E)
        b_out.astype(f32),
        ln2_g.astype(f32), ln2_b.astype(f32),
        w1.astype(bf16), b1.astype(f32),
        w2.astype(bf16), b2.astype(f32),
    )

    def const_spec(arr):
        nd = arr.ndim
        return pl.BlockSpec(arr.shape, lambda b, q, nd=nd: (0,) * nd)

    in_specs = [
        pl.BlockSpec((1, S, E), lambda b, q: (b, 0, 0)),   # full sequence (Q/K/V build, fetched once per b)
        pl.BlockSpec((1, tq, E), lambda b, q: (b, q, 0)),  # query tile (residual)
    ] + [const_spec(p) for p in kparams]

    out_spec = pl.BlockSpec((1, tq, E), lambda b, q: (b, q, 0))

    scratch_shapes = [pltpu.VMEM((n_head, S, d_head), bf16),   # Q (head-major, pre-scaled)
                      pltpu.VMEM((n_head, S, d_head), bf16),   # K (head-major)
                      pltpu.VMEM((n_head, S, d_head), bf16)]   # V (head-major)

    # explicit scoped-VMEM budget: double-buffered blocks + scratch + transients
    blk = 2 * S * E * 4 + 2 * 2 * tq * E * 4
    blk += 2 * sum(int(p.size) * p.dtype.itemsize for p in kparams)
    blk += 3 * n_head * S * d_head * 2
    blk += n_head * tq * S * 6 + n_head * tq * E * 4 + tq * 4 * E * 8
    vmem_limit = int(min(64 * 1024 * 1024, max(32 * 1024 * 1024, 1.3 * blk + (8 << 20))))

    kernel = functools.partial(clip_layer_kernel, n_head=n_head,
                               d_head=d_head, tq=tq)

    return pl.pallas_call(
        kernel,
        out_shape=jax.ShapeDtypeStruct((B, S, E), x.dtype),
        grid_spec=pltpu.PrefetchScalarGridSpec(
            num_scalar_prefetch=0,
            grid=(B, n_q),
            in_specs=in_specs,
            out_specs=out_spec,
            scratch_shapes=scratch_shapes,
        ),
        compiler_params=pltpu.CompilerParams(
            dimension_semantics=("parallel", "arbitrary"),
            vmem_limit_bytes=vmem_limit),
    )(x, x, *kparams)


def clip_layer_ref(x, params, n_head):
    """Pure-JAX f32 reference mirroring the PyTorch forward (for verification)."""
    (ln1_g, ln1_b, w_in, b_in, w_out, b_out,
     ln2_g, ln2_b, w1, b1, w2, b2) = params
    B, S, E = x.shape
    d_head = E // n_head

    def ln(v, g, b):
        mu = jnp.mean(v, axis=-1, keepdims=True)
        var = jnp.mean((v - mu) ** 2, axis=-1, keepdims=True)
        return (v - mu) / jnp.sqrt(var + LN_EPS) * g + b

    residue = x
    h = ln(x, ln1_g, ln1_b)
    qkv = h @ w_in + b_in
    q, k, v = jnp.split(qkv, 3, axis=-1)
    q = q.reshape(B, S, n_head, d_head).transpose(0, 2, 1, 3)
    k = k.reshape(B, S, n_head, d_head).transpose(0, 2, 1, 3)
    v = v.reshape(B, S, n_head, d_head).transpose(0, 2, 1, 3)
    w = jnp.einsum("bhqd,bhkd->bhqk", q, k)
    mask = jnp.triu(jnp.ones((S, S), bool), 1)
    w = jnp.where(mask, -jnp.inf, w) / math.sqrt(d_head)
    w = jax.nn.softmax(w, axis=-1)
    o = jnp.einsum("bhqk,bhkd->bhqd", w, v).transpose(0, 2, 1, 3).reshape(B, S, E)
    o = o @ w_out + b_out
    x1 = o + residue

    residue2 = x1
    h2 = ln(x1, ln2_g, ln2_b)
    h3 = h2 @ w1 + b1
    h3 = h3 * jax.nn.sigmoid(1.702 * h3)
    h4 = h3 @ w2 + b2
    return h4 + residue2


if __name__ == "__main__":
    B, S, E, H = 2, 8, 32, 4   # batch, seq, n_embd, n_head

    key = jax.random.PRNGKey(0)
    ks = jax.random.split(key, 8)

    x = jax.random.normal(ks[0], (B, S, E), jnp.float32)

    params = (
        jnp.ones((1, E), jnp.float32),                                  # ln1 gamma
        jnp.zeros((1, E), jnp.float32),                                 # ln1 beta
        0.05 * jax.random.normal(ks[1], (E, 3 * E), jnp.float32),       # in_proj W  (E, 3E)
        0.05 * jax.random.normal(ks[2], (1, 3 * E), jnp.float32),       # in_proj b
        0.05 * jax.random.normal(ks[3], (E, E), jnp.float32),           # out_proj W
        0.05 * jax.random.normal(ks[4], (1, E), jnp.float32),           # out_proj b
        jnp.ones((1, E), jnp.float32),                                  # ln2 gamma
        jnp.zeros((1, E), jnp.float32),                                 # ln2 beta
        0.05 * jax.random.normal(ks[5], (E, 4 * E), jnp.float32),       # linear_1 W
        0.05 * jax.random.normal(ks[6], (1, 4 * E), jnp.float32),       # linear_1 b
        0.05 * jax.random.normal(ks[7], (4 * E, E), jnp.float32),       # linear_2 W
        jnp.zeros((1, E), jnp.float32),                                 # linear_2 b
    )

    out = clip_layer(x, params, n_head=H)
    out = jax.block_until_ready(out)

    ref = clip_layer_ref(x, params, n_head=H)
    assert out.shape == (B, S, E)
    # bf16 MXU operands + approx reciprocal -> compare at bf16-appropriate tolerance.
    err = float(jnp.max(jnp.abs(out - ref)))
    assert err < 5e-2, f"mismatch vs JAX reference, max abs err = {err}"

    print("KERNEL_OK")
</pallas_src>

<mosaic_0001>
module attributes {stable_mosaic.version = 11 : i64} {
  func.func @clip_layer_kernel(%arg0: i32, %arg1: i32, %arg2: memref<1x8x32xf32, #tpu.memory_space<vmem>>, %arg3: memref<1x8x32xf32, #tpu.memory_space<vmem>>, %arg4: memref<1x32xf32, #tpu.memory_space<vmem>>, %arg5: memref<1x32xf32, #tpu.memory_space<vmem>>, %arg6: memref<32x32xbf16, #tpu.memory_space<vmem>>, %arg7: memref<32x32xbf16, #tpu.memory_space<vmem>>, %arg8: memref<32x32xbf16, #tpu.memory_space<vmem>>, %arg9: memref<1x32xf32, #tpu.memory_space<vmem>>, %arg10: memref<1x32xf32, #tpu.memory_space<vmem>>, %arg11: memref<1x32xf32, #tpu.memory_space<vmem>>, %arg12: memref<4x8x32xbf16, #tpu.memory_space<vmem>>, %arg13: memref<1x32xf32, #tpu.memory_space<vmem>>, %arg14: memref<1x32xf32, #tpu.memory_space<vmem>>, %arg15: memref<1x32xf32, #tpu.memory_space<vmem>>, %arg16: memref<32x128xbf16, #tpu.memory_space<vmem>>, %arg17: memref<1x128xf32, #tpu.memory_space<vmem>>, %arg18: memref<128x32xbf16, #tpu.memory_space<vmem>>, %arg19: memref<1x32xf32, #tpu.memory_space<vmem>>, %arg20: memref<1x8x32xf32, #tpu.memory_space<vmem>>, %arg21: memref<4x8x8xbf16, #tpu.memory_space<vmem>>, %arg22: memref<4x8x8xbf16, #tpu.memory_space<vmem>>, %arg23: memref<4x8x8xbf16, #tpu.memory_space<vmem>>) attributes {dimension_semantics = [#tpu.dimension_semantics<parallel>, #tpu.dimension_semantics<arbitrary>], iteration_bounds = array<i64: 2, 1>, scalar_prefetch = 0 : i64, scratch_operands = 3 : i64, tpu.core_type = #tpu.core_type<tc>, window_params = [{transform_indices = @transform_0, window_bounds = array<i64: 1, 8, 32>}, {transform_indices = @transform_1, window_bounds = array<i64: 1, 8, 32>}, {pipeline_mode = #tpu.pipeline_mode<synchronous>, transform_indices = @transform_2, window_bounds = array<i64: 1, 32>}, {pipeline_mode = #tpu.pipeline_mode<synchronous>, transform_indices = @transform_3, window_bounds = array<i64: 1, 32>}, {pipeline_mode = #tpu.pipeline_mode<synchronous>, transform_indices = @transform_4, window_bounds = array<i64: 32, 32>}, {pipeline_mode = #tpu.pipeline_mode<synchronous>, transform_indices = @transform_5, window_bounds = array<i64: 32, 32>}, {pipeline_mode = #tpu.pipeline_mode<synchronous>, transform_indices = @transform_6, window_bounds = array<i64: 32, 32>}, {pipeline_mode = #tpu.pipeline_mode<synchronous>, transform_indices = @transform_7, window_bounds = array<i64: 1, 32>}, {pipeline_mode = #tpu.pipeline_mode<synchronous>, transform_indices = @transform_8, window_bounds = array<i64: 1, 32>}, {pipeline_mode = #tpu.pipeline_mode<synchronous>, transform_indices = @transform_9, window_bounds = array<i64: 1, 32>}, {pipeline_mode = #tpu.pipeline_mode<synchronous>, transform_indices = @transform_10, window_bounds = array<i64: 4, 8, 32>}, {pipeline_mode = #tpu.pipeline_mode<synchronous>, transform_indices = @transform_11, window_bounds = array<i64: 1, 32>}, {pipeline_mode = #tpu.pipeline_mode<synchronous>, transform_indices = @transform_12, window_bounds = array<i64: 1, 32>}, {pipeline_mode = #tpu.pipeline_mode<synchronous>, transform_indices = @transform_13, window_bounds = array<i64: 1, 32>}, {pipeline_mode = #tpu.pipeline_mode<synchronous>, transform_indices = @transform_14, window_bounds = array<i64: 32, 128>}, {pipeline_mode = #tpu.pipeline_mode<synchronous>, transform_indices = @transform_15, window_bounds = array<i64: 1, 128>}, {pipeline_mode = #tpu.pipeline_mode<synchronous>, transform_indices = @transform_16, window_bounds = array<i64: 128, 32>}, {pipeline_mode = #tpu.pipeline_mode<synchronous>, transform_indices = @transform_17, window_bounds = array<i64: 1, 32>}, {transform_indices = @transform_18, window_bounds = array<i64: 1, 8, 32>}]} {
    %c0_i32 = arith.constant 0 : i32
    %0 = arith.cmpi eq, %arg1, %c0_i32 : i32
    %1 = arith.extui %0 : i1 to i32
    %c0_i32_0 = arith.constant 0 : i32
    %2 = arith.cmpi ne, %1, %c0_i32_0 : i32
    scf.if %2 {
      %c0_47 = arith.constant 0 : index
      %c0_48 = arith.constant 0 : index
      %c0_49 = arith.constant 0 : index
      %91 = vector.load %arg2[%c0_47, %c0_48, %c0_49] : memref<1x8x32xf32, #tpu.memory_space<vmem>>, vector<1x8x32xf32>
      %92 = vector.shape_cast %91 : vector<1x8x32xf32> to vector<8x32xf32>
      %c0_50 = arith.constant 0 : index
      %c0_51 = arith.constant 0 : index
      %93 = vector.load %arg4[%c0_50, %c0_51] : memref<1x32xf32, #tpu.memory_space<vmem>>, vector<1x32xf32>
      %c0_52 = arith.constant 0 : index
      %c0_53 = arith.constant 0 : index
      %94 = vector.load %arg5[%c0_52, %c0_53] : memref<1x32xf32, #tpu.memory_space<vmem>>, vector<1x32xf32>
      %cst_54 = arith.constant dense<0.000000e+00> : vector<8xf32>
      %95 = vector.multi_reduction <add>, %92, %cst_54 [1] : vector<8x32xf32> to vector<8xf32>
      %96 = vector.shape_cast %95 : vector<8xf32> to vector<8x1xf32>
      %cst_55 = arith.constant 3.200000e+01 : f32
      %97 = vector.broadcast %cst_55 : f32 to vector<8x1xf32>
      %98 = arith.divf %96, %97 : vector<8x1xf32>
      %99 = vector.broadcast %98 : vector<8x1xf32> to vector<8x32xf32>
      %100 = arith.subf %92, %99 : vector<8x32xf32>
      %101 = arith.mulf %100, %100 : vector<8x32xf32>
      %cst_56 = arith.constant dense<0.000000e+00> : vector<8xf32>
      %102 = vector.multi_reduction <add>, %101, %cst_56 [1] : vector<8x32xf32> to vector<8xf32>
      %103 = vector.shape_cast %102 : vector<8xf32> to vector<8x1xf32>
      %cst_57 = arith.constant 3.200000e+01 : f32
      %104 = vector.broadcast %cst_57 : f32 to vector<8x1xf32>
      %105 = arith.divf %103, %104 : vector<8x1xf32>
      %106 = vector.broadcast %98 : vector<8x1xf32> to vector<8x32xf32>
      %107 = arith.subf %92, %106 : vector<8x32xf32>
      %cst_58 = arith.constant 9.99999974E-6 : f32
      %108 = vector.broadcast %cst_58 : f32 to vector<8x1xf32>
      %109 = arith.addf %105, %108 : vector<8x1xf32>
      %110 = math.rsqrt %109 : vector<8x1xf32>
      %111 = vector.broadcast %110 : vector<8x1xf32> to vector<8x32xf32>
      %112 = arith.mulf %107, %111 : vector<8x32xf32>
      %113 = vector.broadcast %93 : vector<1x32xf32> to vector<8x32xf32>
      %114 = arith.mulf %112, %113 : vector<8x32xf32>
      %115 = vector.broadcast %94 : vector<1x32xf32> to vector<8x32xf32>
      %116 = arith.addf %114, %115 : vector<8x32xf32>
      %117 = arith.truncf %116 : vector<8x32xf32> to vector<8x32xbf16>
      %c0_59 = arith.constant 0 : index
      %c0_60 = arith.constant 0 : index
      %118 = vector.load %arg6[%c0_59, %c0_60] : memref<32x32xbf16, #tpu.memory_space<vmem>>, vector<32x32xbf16>
      %cst_61 = arith.constant dense<0.000000e+00> : vector<8x32xf32>
      %119 = tpu.matmul %117, %118, %cst_61 {dimension_numbers = #tpu.dot_dimension_numbers<[1], [0], [0], [1], [0, 0, 1, 1], [], []>} : vector<8x32xbf16>, vector<32x32xbf16>, vector<8x32xf32> -> vector<8x32xf32>
      %c0_62 = arith.constant 0 : index
      %c0_63 = arith.constant 0 : index
      %120 = vector.load %arg9[%c0_62, %c0_63] : memref<1x32xf32, #tpu.memory_space<vmem>>, vector<1x32xf32>
      %121 = vector.broadcast %120 : vector<1x32xf32> to vector<8x32xf32>
      %122 = arith.addf %119, %121 : vector<8x32xf32>
      %123 = arith.truncf %122 : vector<8x32xf32> to vector<8x32xbf16>
      %c0_64 = arith.constant 0 : index
      %c0_65 = arith.constant 0 : index
      %124 = vector.load %arg7[%c0_64, %c0_65] : memref<32x32xbf16, #tpu.memory_space<vmem>>, vector<32x32xbf16>
      %cst_66 = arith.constant dense<0.000000e+00> : vector<8x32xf32>
      %125 = tpu.matmul %117, %124, %cst_66 {dimension_numbers = #tpu.dot_dimension_numbers<[1], [0], [0], [1], [0, 0, 1, 1], [], []>} : vector<8x32xbf16>, vector<32x32xbf16>, vector<8x32xf32> -> vector<8x32xf32>
      %c0_67 = arith.constant 0 : index
      %c0_68 = arith.constant 0 : index
      %126 = vector.load %arg10[%c0_67, %c0_68] : memref<1x32xf32, #tpu.memory_space<vmem>>, vector<1x32xf32>
      %127 = vector.broadcast %126 : vector<1x32xf32> to vector<8x32xf32>
      %128 = arith.addf %125, %127 : vector<8x32xf32>
      %129 = arith.truncf %128 : vector<8x32xf32> to vector<8x32xbf16>
      %c0_69 = arith.constant 0 : index
      %c0_70 = arith.constant 0 : index
      %130 = vector.load %arg8[%c0_69, %c0_70] : memref<32x32xbf16, #tpu.memory_space<vmem>>, vector<32x32xbf16>
      %cst_71 = arith.constant dense<0.000000e+00> : vector<8x32xf32>
      %131 = tpu.matmul %117, %130, %cst_71 {dimension_numbers = #tpu.dot_dimension_numbers<[1], [0], [0], [1], [0, 0, 1, 1], [], []>} : vector<8x32xbf16>, vector<32x32xbf16>, vector<8x32xf32> -> vector<8x32xf32>
      %c0_72 = arith.constant 0 : index
      %c0_73 = arith.constant 0 : index
      %132 = vector.load %arg11[%c0_72, %c0_73] : memref<1x32xf32, #tpu.memory_space<vmem>>, vector<1x32xf32>
      %133 = vector.broadcast %132 : vector<1x32xf32> to vector<8x32xf32>
      %134 = arith.addf %131, %133 : vector<8x32xf32>
      %135 = arith.truncf %134 : vector<8x32xf32> to vector<8x32xbf16>
      %136 = vector.extract_strided_slice %123 {offsets = [0, 0], sizes = [8, 8], strides = [1, 1]} : vector<8x32xbf16> to vector<8x8xbf16>
      %c0_74 = arith.constant 0 : index
      %c0_75 = arith.constant 0 : index
      %c0_76 = arith.constant 0 : index
      %137 = vector.load %arg21[%c0_74, %c0_75, %c0_76] : memref<4x8x8xbf16, #tpu.memory_space<vmem>>, vector<1x8x8xbf16>
      %138 = vector.shape_cast %137 : vector<1x8x8xbf16> to vector<8x8xbf16>
      %139 = vector.shape_cast %136 : vector<8x8xbf16> to vector<1x8x8xbf16>
      tpu.vector_store %arg21[%c0_74, %c0_75, %c0_76], %139 {strides = array<i32>} : memref<4x8x8xbf16, #tpu.memory_space<vmem>>, vector<1x8x8xbf16>,
      %140 = vector.extract_strided_slice %129 {offsets = [0, 0], sizes = [8, 8], strides = [1, 1]} : vector<8x32xbf16> to vector<8x8xbf16>
      %c0_77 = arith.constant 0 : index
      %c0_78 = arith.constant 0 : index
      %c0_79 = arith.constant 0 : index
      %141 = vector.load %arg22[%c0_77, %c0_78, %c0_79] : memref<4x8x8xbf16, #tpu.memory_space<vmem>>, vector<1x8x8xbf16>
      %142 = vector.shape_cast %141 : vector<1x8x8xbf16> to vector<8x8xbf16>
      %143 = vector.shape_cast %140 : vector<8x8xbf16> to vector<1x8x8xbf16>
      tpu.vector_store %arg22[%c0_77, %c0_78, %c0_79], %143 {strides = array<i32>} : memref<4x8x8xbf16, #tpu.memory_space<vmem>>, vector<1x8x8xbf16>,
      %144 = vector.extract_strided_slice %135 {offsets = [0, 0], sizes = [8, 8], strides = [1, 1]} : vector<8x32xbf16> to vector<8x8xbf16>
      %c0_80 = arith.constant 0 : index
      %c0_81 = arith.constant 0 : index
      %c0_82 = arith.constant 0 : index
      %145 = vector.load %arg23[%c0_80, %c0_81, %c0_82] : memref<4x8x8xbf16, #tpu.memory_space<vmem>>, vector<1x8x8xbf16>
      %146 = vector.shape_cast %145 : vector<1x8x8xbf16> to vector<8x8xbf16>
      %147 = vector.shape_cast %144 : vector<8x8xbf16> to vector<1x8x8xbf16>
      tpu.vector_store %arg23[%c0_80, %c0_81, %c0_82], %147 {strides = array<i32>} : memref<4x8x8xbf16, #tpu.memory_space<vmem>>, vector<1x8x8xbf16>,
      %148 = vector.extract_strided_slice %123 {offsets = [0, 8], sizes = [8, 8], strides = [1, 1]} : vector<8x32xbf16> to vector<8x8xbf16>
      %c1 = arith.constant 1 : index
      %c0_83 = arith.constant 0 : index
      %c0_84 = arith.constant 0 : index
      %149 = vector.load %arg21[%c1, %c0_83, %c0_84] : memref<4x8x8xbf16, #tpu.memory_space<vmem>>, vector<1x8x8xbf16>
      %150 = vector.shape_cast %149 : vector<1x8x8xbf16> to vector<8x8xbf16>
      %151 = vector.shape_cast %148 : vector<8x8xbf16> to vector<1x8x8xbf16>
      tpu.vector_store %arg21[%c1, %c0_83, %c0_84], %151 {strides = array<i32>} : memref<4x8x8xbf16, #tpu.memory_space<vmem>>, vector<1x8x8xbf16>,
      %152 = vector.extract_strided_slice %129 {offsets = [0, 8], sizes = [8, 8], strides = [1, 1]} : vector<8x32xbf16> to vector<8x8xbf16>
      %c1_85 = arith.constant 1 : index
      %c0_86 = arith.constant 0 : index
      %c0_87 = arith.constant 0 : index
      %153 = vector.load %arg22[%c1_85, %c0_86, %c0_87] : memref<4x8x8xbf16, #tpu.memory_space<vmem>>, vector<1x8x8xbf16>
      %154 = vector.shape_cast %153 : vector<1x8x8xbf16> to vector<8x8xbf16>
      %155 = vector.shape_cast %152 : vector<8x8xbf16> to vector<1x8x8xbf16>
      tpu.vector_store %arg22[%c1_85, %c0_86, %c0_87], %155 {strides = array<i32>} : memref<4x8x8xbf16, #tpu.memory_space<vmem>>, vector<1x8x8xbf16>,
      %156 = vector.extract_strided_slice %135 {offsets = [0, 8], sizes = [8, 8], strides = [1, 1]} : vector<8x32xbf16> to vector<8x8xbf16>
      %c1_88 = arith.constant 1 : index
      %c0_89 = arith.constant 0 : index
      %c0_90 = arith.constant 0 : index
      %157 = vector.load %arg23[%c1_88, %c0_89, %c0_90] : memref<4x8x8xbf16, #tpu.memory_space<vmem>>, vector<1x8x8xbf16>
      %158 = vector.shape_cast %157 : vector<1x8x8xbf16> to vector<8x8xbf16>
      %159 = vector.shape_cast %156 : vector<8x8xbf16> to vector<1x8x8xbf16>
      tpu.vector_store %arg23[%c1_88, %c0_89, %c0_90], %159 {strides = array<i32>} : memref<4x8x8xbf16, #tpu.memory_space<vmem>>, vector<1x8x8xbf16>,
      %160 = vector.extract_strided_slice %123 {offsets = [0, 16], sizes = [8, 8], strides = [1, 1]} : vector<8x32xbf16> to vector<8x8xbf16>
      %c2 = arith.constant 2 : index
      %c0_91 = arith.constant 0 : index
      %c0_92 = arith.constant 0 : index
      %161 = vector.load %arg21[%c2, %c0_91, %c0_92] : memref<4x8x8xbf16, #tpu.memory_space<vmem>>, vector<1x8x8xbf16>
      %162 = vector.shape_cast %161 : vector<1x8x8xbf16> to vector<8x8xbf16>
      %163 = vector.shape_cast %160 : vector<8x8xbf16> to vector<1x8x8xbf16>
      tpu.vector_store %arg21[%c2, %c0_91, %c0_92], %163 {strides = array<i32>} : memref<4x8x8xbf16, #tpu.memory_space<vmem>>, vector<1x8x8xbf16>,
      %164 = vector.extract_strided_slice %129 {offsets = [0, 16], sizes = [8, 8], strides = [1, 1]} : vector<8x32xbf16> to vector<8x8xbf16>
      %c2_93 = arith.constant 2 : index
      %c0_94 = arith.constant 0 : index
      %c0_95 = arith.constant 0 : index
      %165 = vector.load %arg22[%c2_93, %c0_94, %c0_95] : memref<4x8x8xbf16, #tpu.memory_space<vmem>>, vector<1x8x8xbf16>
      %166 = vector.shape_cast %165 : vector<1x8x8xbf16> to vector<8x8xbf16>
      %167 = vector.shape_cast %164 : vector<8x8xbf16> to vector<1x8x8xbf16>
      tpu.vector_store %arg22[%c2_93, %c0_94, %c0_95], %167 {strides = array<i32>} : memref<4x8x8xbf16, #tpu.memory_space<vmem>>, vector<1x8x8xbf16>,
      %168 = vector.extract_strided_slice %135 {offsets = [0, 16], sizes = [8, 8], strides = [1, 1]} : vector<8x32xbf16> to vector<8x8xbf16>
      %c2_96 = arith.constant 2 : index
      %c0_97 = arith.constant 0 : index
      %c0_98 = arith.constant 0 : index
      %169 = vector.load %arg23[%c2_96, %c0_97, %c0_98] : memref<4x8x8xbf16, #tpu.memory_space<vmem>>, vector<1x8x8xbf16>
      %170 = vector.shape_cast %169 : vector<1x8x8xbf16> to vector<8x8xbf16>
      %171 = vector.shape_cast %168 : vector<8x8xbf16> to vector<1x8x8xbf16>
      tpu.vector_store %arg23[%c2_96, %c0_97, %c0_98], %171 {strides = array<i32>} : memref<4x8x8xbf16, #tpu.memory_space<vmem>>, vector<1x8x8xbf16>,
      %172 = vector.extract_strided_slice %123 {offsets = [0, 24], sizes = [8, 8], strides = [1, 1]} : vector<8x32xbf16> to vector<8x8xbf16>
      %c3 = arith.constant 3 : index
      %c0_99 = arith.constant 0 : index
      %c0_100 = arith.constant 0 : index
      %173 = vector.load %arg21[%c3, %c0_99, %c0_100] : memref<4x8x8xbf16, #tpu.memory_space<vmem>>, vector<1x8x8xbf16>
      %174 = vector.shape_cast %173 : vector<1x8x8xbf16> to vector<8x8xbf16>
      %175 = vector.shape_cast %172 : vector<8x8xbf16> to vector<1x8x8xbf16>
      tpu.vector_store %arg21[%c3, %c0_99, %c0_100], %175 {strides = array<i32>} : memref<4x8x8xbf16, #tpu.memory_space<vmem>>, vector<1x8x8xbf16>,
      %176 = vector.extract_strided_slice %129 {offsets = [0, 24], sizes = [8, 8], strides = [1, 1]} : vector<8x32xbf16> to vector<8x8xbf16>
      %c3_101 = arith.constant 3 : index
      %c0_102 = arith.constant 0 : index
      %c0_103 = arith.constant 0 : index
      %177 = vector.load %arg22[%c3_101, %c0_102, %c0_103] : memref<4x8x8xbf16, #tpu.memory_space<vmem>>, vector<1x8x8xbf16>
      %178 = vector.shape_cast %177 : vector<1x8x8xbf16> to vector<8x8xbf16>
      %179 = vector.shape_cast %176 : vector<8x8xbf16> to vector<1x8x8xbf16>
      tpu.vector_store %arg22[%c3_101, %c0_102, %c0_103], %179 {strides = array<i32>} : memref<4x8x8xbf16, #tpu.memory_space<vmem>>, vector<1x8x8xbf16>,
      %180 = vector.extract_strided_slice %135 {offsets = [0, 24], sizes = [8, 8], strides = [1, 1]} : vector<8x32xbf16> to vector<8x8xbf16>
      %c3_104 = arith.constant 3 : index
      %c0_105 = arith.constant 0 : index
      %c0_106 = arith.constant 0 : index
      %181 = vector.load %arg23[%c3_104, %c0_105, %c0_106] : memref<4x8x8xbf16, #tpu.memory_space<vmem>>, vector<1x8x8xbf16>
      %182 = vector.shape_cast %181 : vector<1x8x8xbf16> to vector<8x8xbf16>
      %183 = vector.shape_cast %180 : vector<8x8xbf16> to vector<1x8x8xbf16>
      tpu.vector_store %arg23[%c3_104, %c0_105, %c0_106], %183 {strides = array<i32>} : memref<4x8x8xbf16, #tpu.memory_space<vmem>>, vector<1x8x8xbf16>,
    } else {
    }
    %c0 = arith.constant 0 : index
    %c0_1 = arith.constant 0 : index
    %c0_2 = arith.constant 0 : index
    %3 = vector.load %arg3[%c0, %c0_1, %c0_2] : memref<1x8x32xf32, #tpu.memory_space<vmem>>, vector<1x8x32xf32>
    %4 = vector.shape_cast %3 : vector<1x8x32xf32> to vector<8x32xf32>
    %c8_i32 = arith.constant 8 : i32
    %5 = arith.muli %arg1, %c8_i32 : i32
    %6 = tpu.assume_multiple %5, 8 : i32
    %c0_3 = arith.constant 0 : index
    %7 = arith.index_cast %6 : i32 to index
    %c0_4 = arith.constant 0 : index
    %8 = vector.load %arg21[%c0_3, %7, %c0_4] : memref<4x8x8xbf16, #tpu.memory_space<vmem>>, vector<4x8x8xbf16>
    %c0_5 = arith.constant 0 : index
    %c0_6 = arith.constant 0 : index
    %c0_7 = arith.constant 0 : index
    %9 = vector.load %arg22[%c0_5, %c0_6, %c0_7] : memref<4x8x8xbf16, #tpu.memory_space<vmem>>, vector<4x8x8xbf16>
    "tpu.trace_start"() <{level = 10 : i32, message = "hqd,hkd->hqk"}> : () -> ()
    %cst = arith.constant dense<0.000000e+00> : vector<4x8x8xf32>
    %10 = tpu.matmul %8, %9, %cst {dimension_numbers = #tpu.dot_dimension_numbers<[2], [2], [1], [1], [0, 0, 0, 1, 1, 1], [0], [0]>} : vector<4x8x8xbf16>, vector<4x8x8xbf16>, vector<4x8x8xf32> -> vector<4x8x8xf32>
    "tpu.trace_stop"() : () -> ()
    %11 = tpu.iota {dimensions = array<i32: 0>} : vector<8x8xi32>
    %c8_i32_8 = arith.constant 8 : i32
    %12 = arith.muli %arg1, %c8_i32_8 : i32
    %13 = vector.broadcast %12 : i32 to vector<8x8xi32>
    %14 = arith.addi %11, %13 : vector<8x8xi32>
    %15 = tpu.iota {dimensions = array<i32: 1>} : vector<8x8xi32>
    %16 = arith.cmpi sgt, %15, %14 : vector<8x8xi32>
    %17 = vector.shape_cast %16 : vector<8x8xi1> to vector<1x8x8xi1>
    %cst_9 = arith.constant -1.000000e+30 : f32
    %18 = vector.shape_cast %17 : vector<1x8x8xi1> to vector<1x8x8xi1>
    %19 = vector.broadcast %18 : vector<1x8x8xi1> to vector<4x8x8xi1>
    %20 = vector.broadcast %cst_9 : f32 to vector<4x8x8xf32>
    %21 = arith.select %19, %20, %10 : vector<4x8x8xi1>, vector<4x8x8xf32>
    %cst_10 = arith.constant dense<0xFF800000> : vector<4x8xf32>
    %22 = vector.multi_reduction <maximumf>, %21, %cst_10 [2] : vector<4x8x8xf32> to vector<4x8xf32>
    %23 = vector.shape_cast %22 : vector<4x8xf32> to vector<4x8x1xf32>
    %24 = vector.broadcast %23 : vector<4x8x1xf32> to vector<4x8x8xf32>
    %25 = arith.subf %21, %24 : vector<4x8x8xf32>
    %26 = math.exp %25 : vector<4x8x8xf32>
    %cst_11 = arith.constant dense<0.000000e+00> : vector<4x8xf32>
    %27 = vector.multi_reduction <add>, %26, %cst_11 [2] : vector<4x8x8xf32> to vector<4x8xf32>
    %28 = vector.shape_cast %27 : vector<4x8xf32> to vector<4x8x1xf32>
    %29 = tpu.reciprocal %28 {approx = true} : vector<4x8x1xf32> -> vector<4x8x1xf32>
    %30 = vector.broadcast %29 : vector<4x8x1xf32> to vector<4x8x8xf32>
    %31 = arith.mulf %26, %30 : vector<4x8x8xf32>
    %32 = arith.truncf %31 : vector<4x8x8xf32> to vector<4x8x8xbf16>
    %c0_12 = arith.constant 0 : index
    %c0_13 = arith.constant 0 : index
    %c0_14 = arith.constant 0 : index
    %33 = vector.load %arg23[%c0_12, %c0_13, %c0_14] : memref<4x8x8xbf16, #tpu.memory_space<vmem>>, vector<4x8x8xbf16>
    "tpu.trace_start"() <{level = 10 : i32, message = "hqk,hkd->hqd"}> : () -> ()
    %cst_15 = arith.constant dense<0.000000e+00> : vector<4x8x8xf32>
    %34 = tpu.matmul %32, %33, %cst_15 {dimension_numbers = #tpu.dot_dimension_numbers<[2], [1], [1], [2], [0, 0, 0, 1, 1, 2], [0], [0]>} : vector<4x8x8xbf16>, vector<4x8x8xbf16>, vector<4x8x8xf32> -> vector<4x8x8xf32>
    "tpu.trace_stop"() : () -> ()
    %35 = arith.truncf %34 : vector<4x8x8xf32> to vector<4x8x8xbf16>
    %c0_16 = arith.constant 0 : index
    %c0_17 = arith.constant 0 : index
    %c0_18 = arith.constant 0 : index
    %36 = vector.load %arg12[%c0_16, %c0_17, %c0_18] : memref<4x8x32xbf16, #tpu.memory_space<vmem>>, vector<4x8x32xbf16>
    "tpu.trace_start"() <{level = 10 : i32, message = "hqd,hde->hqe"}> : () -> ()
    %cst_19 = arith.constant dense<0.000000e+00> : vector<4x8x32xf32>
    %37 = tpu.matmul %35, %36, %cst_19 {dimension_numbers = #tpu.dot_dimension_numbers<[2], [1], [1], [2], [0, 0, 0, 1, 1, 2], [0], [0]>} : vector<4x8x8xbf16>, vector<4x8x32xbf16>, vector<4x8x32xf32> -> vector<4x8x32xf32>
    "tpu.trace_stop"() : () -> ()
    %cst_20 = arith.constant dense<0.000000e+00> : vector<8x32xf32>
    %38 = vector.multi_reduction <add>, %37, %cst_20 [0] : vector<4x8x32xf32> to vector<8x32xf32>
    %c0_21 = arith.constant 0 : index
    %c0_22 = arith.constant 0 : index
    %39 = vector.load %arg13[%c0_21, %c0_22] : memref<1x32xf32, #tpu.memory_space<vmem>>, vector<1x32xf32>
    %40 = vector.broadcast %39 : vector<1x32xf32> to vector<8x32xf32>
    %41 = arith.addf %38, %40 : vector<8x32xf32>
    %42 = arith.addf %41, %4 : vector<8x32xf32>
    %c0_23 = arith.constant 0 : index
    %c0_24 = arith.constant 0 : index
    %43 = vector.load %arg14[%c0_23, %c0_24] : memref<1x32xf32, #tpu.memory_space<vmem>>, vector<1x32xf32>
    %c0_25 = arith.constant 0 : index
    %c0_26 = arith.constant 0 : index
    %44 = vector.load %arg15[%c0_25, %c0_26] : memref<1x32xf32, #tpu.memory_space<vmem>>, vector<1x32xf32>
    %cst_27 = arith.constant dense<0.000000e+00> : vector<8xf32>
    %45 = vector.multi_reduction <add>, %42, %cst_27 [1] : vector<8x32xf32> to vector<8xf32>
    %46 = vector.shape_cast %45 : vector<8xf32> to vector<8x1xf32>
    %cst_28 = arith.constant 3.200000e+01 : f32
    %47 = vector.broadcast %cst_28 : f32 to vector<8x1xf32>
    %48 = arith.divf %46, %47 : vector<8x1xf32>
    %49 = vector.broadcast %48 : vector<8x1xf32> to vector<8x32xf32>
    %50 = arith.subf %42, %49 : vector<8x32xf32>
    %51 = arith.mulf %50, %50 : vector<8x32xf32>
    %cst_29 = arith.constant dense<0.000000e+00> : vector<8xf32>
    %52 = vector.multi_reduction <add>, %51, %cst_29 [1] : vector<8x32xf32> to vector<8xf32>
    %53 = vector.shape_cast %52 : vector<8xf32> to vector<8x1xf32>
    %cst_30 = arith.constant 3.200000e+01 : f32
    %54 = vector.broadcast %cst_30 : f32 to vector<8x1xf32>
    %55 = arith.divf %53, %54 : vector<8x1xf32>
    %56 = vector.broadcast %48 : vector<8x1xf32> to vector<8x32xf32>
    %57 = arith.subf %42, %56 : vector<8x32xf32>
    %cst_31 = arith.constant 9.99999974E-6 : f32
    %58 = vector.broadcast %cst_31 : f32 to vector<8x1xf32>
    %59 = arith.addf %55, %58 : vector<8x1xf32>
    %60 = math.rsqrt %59 : vector<8x1xf32>
    %61 = vector.broadcast %60 : vector<8x1xf32> to vector<8x32xf32>
    %62 = arith.mulf %57, %61 : vector<8x32xf32>
    %63 = vector.broadcast %43 : vector<1x32xf32> to vector<8x32xf32>
    %64 = arith.mulf %62, %63 : vector<8x32xf32>
    %65 = vector.broadcast %44 : vector<1x32xf32> to vector<8x32xf32>
    %66 = arith.addf %64, %65 : vector<8x32xf32>
    %67 = arith.truncf %66 : vector<8x32xf32> to vector<8x32xbf16>
    %c0_32 = arith.constant 0 : index
    %c0_33 = arith.constant 0 : index
    %68 = vector.load %arg16[%c0_32, %c0_33] : memref<32x128xbf16, #tpu.memory_space<vmem>>, vector<32x128xbf16>
    %cst_34 = arith.constant dense<0.000000e+00> : vector<8x128xf32>
    %69 = tpu.matmul %67, %68, %cst_34 {dimension_numbers = #tpu.dot_dimension_numbers<[1], [0], [0], [1], [0, 0, 1, 1], [], []>} : vector<8x32xbf16>, vector<32x128xbf16>, vector<8x128xf32> -> vector<8x128xf32>
    %c0_35 = arith.constant 0 : index
    %c0_36 = arith.constant 0 : index
    %70 = vector.load %arg17[%c0_35, %c0_36] : memref<1x128xf32, #tpu.memory_space<vmem>>, vector<1x128xf32>
    %71 = vector.broadcast %70 : vector<1x128xf32> to vector<8x128xf32>
    %72 = arith.addf %69, %71 : vector<8x128xf32>
    %cst_37 = arith.constant 1.702000e+00 : f32
    %73 = vector.broadcast %cst_37 : f32 to vector<8x128xf32>
    %74 = arith.mulf %73, %72 : vector<8x128xf32>
    %75 = arith.negf %74 : vector<8x128xf32>
    %76 = math.exp %75 : vector<8x128xf32>
    %cst_38 = arith.constant 1.000000e+00 : f32
    %77 = vector.broadcast %cst_38 : f32 to vector<8x128xf32>
    %78 = arith.addf %77, %76 : vector<8x128xf32>
    %79 = arith.divf %77, %78 : vector<8x128xf32>
    %80 = arith.mulf %72, %79 : vector<8x128xf32>
    %81 = arith.truncf %80 : vector<8x128xf32> to vector<8x128xbf16>
    %c0_39 = arith.constant 0 : index
    %c0_40 = arith.constant 0 : index
    %82 = vector.load %arg18[%c0_39, %c0_40] : memref<128x32xbf16, #tpu.memory_space<vmem>>, vector<128x32xbf16>
    %cst_41 = arith.constant dense<0.000000e+00> : vector<8x32xf32>
    %83 = tpu.matmul %81, %82, %cst_41 {dimension_numbers = #tpu.dot_dimension_numbers<[1], [0], [0], [1], [0, 0, 1, 1], [], []>} : vector<8x128xbf16>, vector<128x32xbf16>, vector<8x32xf32> -> vector<8x32xf32>
    %c0_42 = arith.constant 0 : index
    %c0_43 = arith.constant 0 : index
    %84 = vector.load %arg19[%c0_42, %c0_43] : memref<1x32xf32, #tpu.memory_space<vmem>>, vector<1x32xf32>
    %85 = vector.broadcast %84 : vector<1x32xf32> to vector<8x32xf32>
    %86 = arith.addf %83, %85 : vector<8x32xf32>
    %87 = arith.addf %86, %42 : vector<8x32xf32>
    %c0_44 = arith.constant 0 : index
    %c0_45 = arith.constant 0 : index
    %c0_46 = arith.constant 0 : index
    %88 = vector.load %arg20[%c0_44, %c0_45, %c0_46] : memref<1x8x32xf32, #tpu.memory_space<vmem>>, vector<1x8x32xf32>
    %89 = vector.shape_cast %88 : vector<1x8x32xf32> to vector<8x32xf32>
    %90 = vector.shape_cast %87 : vector<8x32xf32> to vector<1x8x32xf32>
    tpu.vector_store %arg20[%c0_44, %c0_45, %c0_46], %90 {strides = array<i32>} : memref<1x8x32xf32, #tpu.memory_space<vmem>>, vector<1x8x32xf32>,
    return
  }
  func.func @transform_0(%arg0: i32, %arg1: i32) -> (i32, i32, i32) {
    %c0_i32 = arith.constant 0 : i32
    %c0_i32_0 = arith.constant 0 : i32
    %c0_i32_1 = arith.constant 0 : i32
    return %arg0, %c0_i32, %c0_i32_0 : i32, i32, i32
  }
  func.func @transform_1(%arg0: i32, %arg1: i32) -> (i32, i32, i32) {
    %c0_i32 = arith.constant 0 : i32
    %c0_i32_0 = arith.constant 0 : i32
    return %arg0, %arg1, %c0_i32 : i32, i32, i32
  }
  func.func @transform_2(%arg0: i32, %arg1: i32) -> (i32, i32) {
    %c0_i32 = arith.constant 0 : i32
    %c0_i32_0 = arith.constant 0 : i32
    %c0_i32_1 = arith.constant 0 : i32
    return %c0_i32, %c0_i32_0 : i32, i32
  }
  func.func @transform_3(%arg0: i32, %arg1: i32) -> (i32, i32) {
    %c0_i32 = arith.constant 0 : i32
    %c0_i32_0 = arith.constant 0 : i32
    %c0_i32_1 = arith.constant 0 : i32
    return %c0_i32, %c0_i32_0 : i32, i32
  }
  func.func @transform_4(%arg0: i32, %arg1: i32) -> (i32, i32) {
    %c0_i32 = arith.constant 0 : i32
    %c0_i32_0 = arith.constant 0 : i32
    %c0_i32_1 = arith.constant 0 : i32
    return %c0_i32, %c0_i32_0 : i32, i32
  }
  func.func @transform_5(%arg0: i32, %arg1: i32) -> (i32, i32) {
    %c0_i32 = arith.constant 0 : i32
    %c0_i32_0 = arith.constant 0 : i32
    %c0_i32_1 = arith.constant 0 : i32
    return %c0_i32, %c0_i32_0 : i32, i32
  }
  func.func @transform_6(%arg0: i32, %arg1: i32) -> (i32, i32) {
    %c0_i32 = arith.constant 0 : i32
    %c0_i32_0 = arith.constant 0 : i32
    %c0_i32_1 = arith.constant 0 : i32
    return %c0_i32, %c0_i32_0 : i32, i32
  }
  func.func @transform_7(%arg0: i32, %arg1: i32) -> (i32, i32) {
    %c0_i32 = arith.constant 0 : i32
    %c0_i32_0 = arith.constant 0 : i32
    %c0_i32_1 = arith.constant 0 : i32
    return %c0_i32, %c0_i32_0 : i32, i32
  }
  func.func @transform_8(%arg0: i32, %arg1: i32) -> (i32, i32) {
    %c0_i32 = arith.constant 0 : i32
    %c0_i32_0 = arith.constant 0 : i32
    %c0_i32_1 = arith.constant 0 : i32
    return %c0_i32, %c0_i32_0 : i32, i32
  }
  func.func @transform_9(%arg0: i32, %arg1: i32) -> (i32, i32) {
    %c0_i32 = arith.constant 0 : i32
    %c0_i32_0 = arith.constant 0 : i32
    %c0_i32_1 = arith.constant 0 : i32
    return %c0_i32, %c0_i32_0 : i32, i32
  }
  func.func @transform_10(%arg0: i32, %arg1: i32) -> (i32, i32, i32) {
    %c0_i32 = arith.constant 0 : i32
    %c0_i32_0 = arith.constant 0 : i32
    %c0_i32_1 = arith.constant 0 : i32
    %c0_i32_2 = arith.constant 0 : i32
    return %c0_i32, %c0_i32_0, %c0_i32_1 : i32, i32, i32
  }
  func.func @transform_11(%arg0: i32, %arg1: i32) -> (i32, i32) {
    %c0_i32 = arith.constant 0 : i32
    %c0_i32_0 = arith.constant 0 : i32
    %c0_i32_1 = arith.constant 0 : i32
    return %c0_i32, %c0_i32_0 : i32, i32
  }
  func.func @transform_12(%arg0: i32, %arg1: i32) -> (i32, i32) {
    %c0_i32 = arith.constant 0 : i32
    %c0_i32_0 = arith.constant 0 : i32
    %c0_i32_1 = arith.constant 0 : i32
    return %c0_i32, %c0_i32_0 : i32, i32
  }
  func.func @transform_13(%arg0: i32, %arg1: i32) -> (i32, i32) {
    %c0_i32 = arith.constant 0 : i32
    %c0_i32_0 = arith.constant 0 : i32
    %c0_i32_1 = arith.constant 0 : i32
    return %c0_i32, %c0_i32_0 : i32, i32
  }
  func.func @transform_14(%arg0: i32, %arg1: i32) -> (i32, i32) {
    %c0_i32 = arith.constant 0 : i32
    %c0_i32_0 = arith.constant 0 : i32
    %c0_i32_1 = arith.constant 0 : i32
    return %c0_i32, %c0_i32_0 : i32, i32
  }
  func.func @transform_15(%arg0: i32, %arg1: i32) -> (i32, i32) {
    %c0_i32 = arith.constant 0 : i32
    %c0_i32_0 = arith.constant 0 : i32
    %c0_i32_1 = arith.constant 0 : i32
    return %c0_i32, %c0_i32_0 : i32, i32
  }
  func.func @transform_16(%arg0: i32, %arg1: i32) -> (i32, i32) {
    %c0_i32 = arith.constant 0 : i32
    %c0_i32_0 = arith.constant 0 : i32
    %c0_i32_1 = arith.constant 0 : i32
    return %c0_i32, %c0_i32_0 : i32, i32
  }
  func.func @transform_17(%arg0: i32, %arg1: i32) -> (i32, i32) {
    %c0_i32 = arith.constant 0 : i32
    %c0_i32_0 = arith.constant 0 : i32
    %c0_i32_1 = arith.constant 0 : i32
    return %c0_i32, %c0_i32_0 : i32, i32
  }
  func.func @transform_18(%arg0: i32, %arg1: i32) -> (i32, i32, i32) {
    %c0_i32 = arith.constant 0 : i32
    %c0_i32_0 = arith.constant 0 : i32
    return %arg0, %arg1, %c0_i32 : i32, i32, i32
  }
}

</mosaic_0001>

<llo_original>
// kernel: tpu_custom_call.1
$region0: #{tpu_custom_call.1}
  #allocation0 [shape = 'u32[]', space=smem, size = 0x4, offset = 0x4, fixed_abs, tag = 'smem constant byte address 0x4 - core index']
  #allocation1 [shape = 'u32[144,128]{1,0:T(1,128)}', space=vmem, size = 0x12000, scoped, tag = 'internal scratch']
  #allocation2 [shape = 'bf16[4,8,8]{2,1,0:T(8,128)(2,1)}', space=vmem, size = 0x2000, scoped, tag = 'scratch operand']
  #allocation3 [shape = 'bf16[4,8,8]{2,1,0:T(8,128)(2,1)}', space=vmem, size = 0x2000, scoped, tag = 'scratch operand']
  #allocation4 [shape = 'bf16[4,8,8]{2,1,0:T(8,128)(2,1)}', space=vmem, size = 0x2000, scoped, tag = 'scratch operand']
  %s0 = inlined_call_operand.vmem [shape: f32[2,8,32], index: 0, kind: input, shape index: {}]
  %s1 = inlined_call_operand.vmem [shape: f32[2,8,32], index: 1, kind: input, shape index: {}]
  %s2 = inlined_call_operand.vmem [shape: f32[1,32], index: 2, kind: input, shape index: {}]
  %s3 = inlined_call_operand.hbm [shape: f32[1,32], index: 3, kind: input, shape index: {}]
  %s4 = inlined_call_operand.vmem [shape: bf16[32,32], index: 4, kind: input, shape index: {}]
  %s5 = inlined_call_operand.vmem [shape: bf16[32,32], index: 5, kind: input, shape index: {}]
  %s6 = inlined_call_operand.vmem [shape: bf16[32,32], index: 6, kind: input, shape index: {}]
  %s7 = inlined_call_operand.hbm [shape: f32[1,32], index: 7, kind: input, shape index: {}]
  %s8 = inlined_call_operand.hbm [shape: f32[1,32], index: 8, kind: input, shape index: {}]
  %s9 = inlined_call_operand.hbm [shape: f32[1,32], index: 9, kind: input, shape index: {}]
  %s10 = inlined_call_operand.vmem [shape: bf16[4,8,32], index: 10, kind: input, shape index: {}]
  %s11 = inlined_call_operand.hbm [shape: f32[1,32], index: 11, kind: input, shape index: {}]
  %s12 = inlined_call_operand.hbm [shape: f32[1,32], index: 12, kind: input, shape index: {}]
  %s13 = inlined_call_operand.hbm [shape: f32[1,32], index: 13, kind: input, shape index: {}]
  %s14 = inlined_call_operand.vmem [shape: bf16[32,128], index: 14, kind: input, shape index: {}]
  %s15 = inlined_call_operand.vmem [shape: f32[1,128], index: 15, kind: input, shape index: {}]
  %s16 = inlined_call_operand.vmem [shape: bf16[128,32], index: 16, kind: input, shape index: {}]
  %s17 = inlined_call_operand.vmem [shape: f32[1,32], index: 17, kind: input, shape index: {}]
  %s18 = inlined_call_operand.hbm [shape: f32[2,8,32], index: 18, kind: output, shape index: {}]
  %s19 = sld [smem:[#allocation0]]
  $region137: #{tpu_custom_call.1} parent=0
    _
  %s21 = ssub.s32 1, %s19
  %s22 = scalar_select 0, %s21, %s19
  $region1: #{tpu_custom_call.1} parent=0
    #allocation5 [shape = 'u8[512]{0}', space=vmem, size = 0x400, scoped, tag = 'input window, operand 3, single buffered']
    #allocation6 [shape = 's32[2]{0}', space=sflag, size = 0x8, scoped, tag = 'scoped memory for tpu_custom_call.1']
    #allocation7 [shape = 's32[2]{0}', space=sflag, size = 0x8, scoped, tag = 'scoped memory for tpu_custom_call.1']
    #allocation8 [shape = 'u8[512]{0}', space=vmem, size = 0x400, scoped, tag = 'input window, operand 7, single buffered']
    #allocation9 [shape = 's32[1]{0}', space=sflag, size = 0x4, scoped, tag = 'scoped memory for tpu_custom_call.1']
    #allocation10 [shape = 'u8[512]{0}', space=vmem, size = 0x400, scoped, tag = 'input window, operand 8, single buffered']
    #allocation11 [shape = 'u8[512]{0}', space=vmem, size = 0x400, scoped, tag = 'input window, operand 9, single buffered']
    #allocation12 [shape = 's32[1]{0}', space=sflag, size = 0x4, scoped, tag = 'scoped memory for tpu_custom_call.1']
    #allocation13 [shape = 'u8[512]{0}', space=vmem, size = 0x400, scoped, tag = 'input window, operand 11, single buffered']
    #allocation14 [shape = 'u8[512]{0}', space=vmem, size = 0x400, scoped, tag = 'input window, operand 12, single buffered']
    #allocation15 [shape = 's32[1]{0}', space=sflag, size = 0x4, scoped, tag = 'scoped memory for tpu_custom_call.1']
    #allocation16 [shape = 'u8[512]{0}', space=vmem, size = 0x400, scoped, tag = 'input window, operand 13, single buffered']
    #allocation17 [shape = 'u8[8192]{0}', space=vmem, size = 0x2000, scoped, tag = 'output window, operand 0']
    %23 = vsyncpa [#allocation6], 0
    %24 = vsyncpa [#allocation9], 0
    %25 = vsyncpa [#allocation12], 0
    %26 = vsyncpa [#allocation15], 0
    %27 = vsyncpa [#allocation7], 0
    %s28 = scalar_lea.sflag [#allocation7], 1
    %29 = vsyncpa %s28, 0
    loop: start=0, step=1, limit=4
    $region2: #{tpu_custom_call.1} parent=1 // loop_pre_header
      _
    $region3: #{tpu_custom_call.1} parent=1 // loop_header
      %s31 = sphi 0, %s35
      %p32 = scmp.ge.s32.totalorder %s31, 4
      %s38 = sphi 0, %s50
      %s39 = sphi 0, %s46
      %s40 = sphi 0, %s38
      %s41 = sphi 0, %s39
      %s42 = sphi 0, %s40
      %s43 = sphi 0, %s41
      %s53 = sphi 0, %s55
      %s56 = sphi 0, %s53
      %s57 = sphi 0, %s56
      %s73 = sphi 0, %s57
      %s81 = sphi 0, %s83
      %s84 = sphi 0, %s81
      %s85 = sphi 0, %s84
      %s101 = sphi 0, %s85
      %s105 = sphi 0, %s105
      %s107 = sphi 0, %s105
      %s108 = sphi 0, %s107
      %s122 = sphi 0, %s108
      %s126 = sphi 0, %s126
      %s128 = sphi 0, %s126
      %s129 = sphi 0, %s128
      %s143 = sphi 0, %s129
      %s147 = sphi 0, %s147
      %s149 = sphi 0, %s147
      %s150 = sphi 0, %s149
      %s164 = sphi 0, %s150
      %s168 = sphi 0, %s168
      %s170 = sphi 0, %s168
      %s171 = sphi 0, %s170
      %s185 = sphi 0, %s171
      %s189 = sphi 0, %s189
      %s191 = sphi 0, %s189
      %s192 = sphi 0, %s191
      %s206 = sphi 0, %s192
      %s210 = sphi 0, %s210
      %s212 = sphi 0, %s210
      %s213 = sphi 0, %s212
      %s227 = sphi 0, %s213
      %s231 = sphi 0, %s231
      %s233 = sphi 0, %s231
      %s234 = sphi 0, %s233
      %s248 = sphi 0, %s234
      %s252 = sphi 0, %s252
      %s254 = sphi 0, %s252
      %s255 = sphi 0, %s254
      %s269 = sphi 0, %s255
      %s273 = sphi 0, %s273
      %s275 = sphi 0, %s273
      %s276 = sphi 0, %s275
      %s290 = sphi 0, %s276
      %s294 = sphi 0, %s294
      %s296 = sphi 0, %s294
      %s297 = sphi 0, %s296
      %s311 = sphi 0, %s297
      %s315 = sphi 0, %s315
      %s317 = sphi 0, %s315
      %s318 = sphi 0, %s317
      %s332 = sphi 0, %s318
      %s336 = sphi 0, %s336
      %s338 = sphi 0, %s336
      %s339 = sphi 0, %s338
      %s353 = sphi 0, %s339
      %s357 = sphi 0, %s357
      %s359 = sphi 0, %s357
      %s360 = sphi 0, %s359
      %s374 = sphi 0, %s360
      %s378 = sphi 0, %s378
      %s380 = sphi 0, %s378
      %s381 = sphi 0, %s380
      %s395 = sphi 0, %s381
      %s399 = sphi 0, %s399
      %s401 = sphi 0, %s399
      %s402 = sphi 0, %s401
      %s416 = sphi 0, %s402
      %s420 = sphi 0, %s420
      %s422 = sphi 0, %s420
      %s423 = sphi 0, %s422
      %s437 = sphi 0, %s423
      %s445 = sphi 0, %s447
      %s448 = sphi 0, %s445
      %s449 = sphi 0, %s448
      %s465 = sphi 0, %s449
    $region4: #{tpu_custom_call.1} parent=1 // loop_header_branch
      %34 = sbr.rel (%p32) target = $region8
    $region5: #{tpu_custom_call.1} parent=1 // loop_body
      %s36 = ssub.s32 %s31, 1
      %s37 = ssub.s32 %s31, 2
      %s44 = sadd.s32 1, %s39
      %p45 = scmp.ge.s32.totalorder %s44, 1
      %s46 = scalar_select %p45, 0, %s44
      %s47 = sadd.s32 1, %s38
      %s48 = scalar_select %p45, %s47, %s38
      %p49 = scmp.ge.s32.totalorder %s48, 2
      %s50 = scalar_select %p49, 0, %s48
      %s51 = ssub.s32 %s38, %s50
      %p52 = scmp.eq.s32.totalorder %s51, 0
      %s54 = sadd.s32 %s53, 1
      %s55 = scalar_select %p52, %s53, %s54
      %p58 = pneg %p52
      %p59 = scmp.eq.s32.totalorder %s31, 1
      %p60 = por %p58, %p59
      %p61 = scmp.ne.s32.totalorder %s53, %s56
      %p62 = scmp.eq.s32.totalorder %s31, 0
      %p63 = por %p61, %p62
      %p64 = scmp.ne.s32.totalorder %s53, %s56
      %p65 = scmp.eq.s32.totalorder %s36, 1
      %p66 = por %p64, %p65
      %p67 = scmp.ne.s32.totalorder %s56, %s57
      %p68 = scmp.eq.s32.totalorder %s36, 0
      %p69 = por %p67, %p68
      %p70 = scmp.ne.s32.totalorder %s56, %s57
      %p71 = scmp.eq.s32.totalorder %s37, 1
      %p72 = por %p70, %p71
      %p74 = scmp.ne.s32.totalorder %s57, %s73
      %p75 = scmp.eq.s32.totalorder %s37, 0
      %p76 = por %p74, %p75
      %s77 = ssub.s32 %s38, %s50
      %s78 = ssub.s32 %s39, %s46
      %s79 = sor.u32 %s77, %s78
      %p80 = scmp.eq.s32.totalorder %s79, 0
      %s82 = sadd.s32 %s81, 1
      %s83 = scalar_select %p80, %s81, %s82
      %p86 = pneg %p80
      %p87 = scmp.eq.s32.totalorder %s31, 1
      %p88 = por %p86, %p87
      %p89 = scmp.ne.s32.totalorder %s81, %s84
      %p90 = scmp.eq.s32.totalorder %s31, 0
      %p91 = por %p89, %p90
      %p92 = scmp.ne.s32.totalorder %s81, %s84
      %p93 = scmp.eq.s32.totalorder %s36, 1
      %p94 = por %p92, %p93
      %p95 = scmp.ne.s32.totalorder %s84, %s85
      %p96 = scmp.eq.s32.totalorder %s36, 0
      %p97 = por %p95, %p96
      %p98 = scmp.ne.s32.totalorder %s84, %s85
      %p99 = scmp.eq.s32.totalorder %s37, 1
      %p100 = por %p98, %p99
      %p102 = scmp.ne.s32.totalorder %s85, %s101
      %p103 = scmp.eq.s32.totalorder %s37, 0
      %p104 = por %p102, %p103
      %s106 = sadd.s32 %s105, 1
      %p109 = scmp.eq.s32.totalorder %s31, 1
      %p110 = scmp.ne.s32.totalorder %s105, %s107
      %p111 = scmp.eq.s32.totalorder %s31, 0
      %p112 = por %p110, %p111
      %p113 = scmp.ne.s32.totalorder %s105, %s107
      %p114 = scmp.eq.s32.totalorder %s36, 1
      %p115 = por %p113, %p114
      %p116 = scmp.ne.s32.totalorder %s107, %s108
      %p117 = scmp.eq.s32.totalorder %s36, 0
      %p118 = por %p116, %p117
      %p119 = scmp.ne.s32.totalorder %s107, %s108
      %p120 = scmp.eq.s32.totalorder %s37, 1
      %p121 = por %p119, %p120
      %p123 = scmp.ne.s32.totalorder %s108, %s122
      %p124 = scmp.eq.s32.totalorder %s37, 0
      %p125 = por %p123, %p124
      %s127 = sadd.s32 %s126, 1
      %p130 = scmp.eq.s32.totalorder %s31, 1
      %p131 = scmp.ne.s32.totalorder %s126, %s128
      %p132 = scmp.eq.s32.totalorder %s31, 0
      %p133 = por %p131, %p132
      %p134 = scmp.ne.s32.totalorder %s126, %s128
      %p135 = scmp.eq.s32.totalorder %s36, 1
      %p136 = por %p134, %p135
      %p137 = scmp.ne.s32.totalorder %s128, %s129
      %p138 = scmp.eq.s32.totalorder %s36, 0
      %p139 = por %p137, %p138
      %p140 = scmp.ne.s32.totalorder %s128, %s129
      %p141 = scmp.eq.s32.totalorder %s37, 1
      %p142 = por %p140, %p141
      %p144 = scmp.ne.s32.totalorder %s129, %s143
      %p145 = scmp.eq.s32.totalorder %s37, 0
      %p146 = por %p144, %p145
      %s148 = sadd.s32 %s147, 1
      %p151 = scmp.eq.s32.totalorder %s31, 1
      %p152 = scmp.ne.s32.totalorder %s147, %s149
      %p153 = scmp.eq.s32.totalorder %s31, 0
      %p154 = por %p152, %p153
      %p155 = scmp.ne.s32.totalorder %s147, %s149
      %p156 = scmp.eq.s32.totalorder %s36, 1
      %p157 = por %p155, %p156
      %p158 = scmp.ne.s32.totalorder %s149, %s150
      %p159 = scmp.eq.s32.totalorder %s36, 0
      %p160 = por %p158, %p159
      %p161 = scmp.ne.s32.totalorder %s149, %s150
      %p162 = scmp.eq.s32.totalorder %s37, 1
      %p163 = por %p161, %p162
      %p165 = scmp.ne.s32.totalorder %s150, %s164
      %p166 = scmp.eq.s32.totalorder %s37, 0
      %p167 = por %p165, %p166
      %s169 = sadd.s32 %s168, 1
      %p172 = scmp.eq.s32.totalorder %s31, 1
      %p173 = scmp.ne.s32.totalorder %s168, %s170
      %p174 = scmp.eq.s32.totalorder %s31, 0
      %p175 = por %p173, %p174
      %p176 = scmp.ne.s32.totalorder %s168, %s170
      %p177 = scmp.eq.s32.totalorder %s36, 1
      %p178 = por %p176, %p177
      %p179 = scmp.ne.s32.totalorder %s170, %s171
      %p180 = scmp.eq.s32.totalorder %s36, 0
      %p181 = por %p179, %p180
      %p182 = scmp.ne.s32.totalorder %s170, %s171
      %p183 = scmp.eq.s32.totalorder %s37, 1
      %p184 = por %p182, %p183
      %p186 = scmp.ne.s32.totalorder %s171, %s185
      %p187 = scmp.eq.s32.totalorder %s37, 0
      %p188 = por %p186, %p187
      %s190 = sadd.s32 %s189, 1
      %p193 = scmp.eq.s32.totalorder %s31, 1
      %p194 = scmp.ne.s32.totalorder %s189, %s191
      %p195 = scmp.eq.s32.totalorder %s31, 0
      %p196 = por %p194, %p195
      %p197 = scmp.ne.s32.totalorder %s189, %s191
      %p198 = scmp.eq.s32.totalorder %s36, 1
      %p199 = por %p197, %p198
      %p200 = scmp.ne.s32.totalorder %s191, %s192
      %p201 = scmp.eq.s32.totalorder %s36, 0
      %p202 = por %p200, %p201
      %p203 = scmp.ne.s32.totalorder %s191, %s192
      %p204 = scmp.eq.s32.totalorder %s37, 1
      %p205 = por %p203, %p204
      %p207 = scmp.ne.s32.totalorder %s192, %s206
      %p208 = scmp.eq.s32.totalorder %s37, 0
      %p209 = por %p207, %p208
      %s211 = sadd.s32 %s210, 1
      %p214 = scmp.eq.s32.totalorder %s31, 1
      %p215 = scmp.ne.s32.totalorder %s210, %s212
      %p216 = scmp.eq.s32.totalorder %s31, 0
      %p217 = por %p215, %p216
      %p218 = scmp.ne.s32.totalorder %s210, %s212
      %p219 = scmp.eq.s32.totalorder %s36, 1
      %p220 = por %p218, %p219
      %p221 = scmp.ne.s32.totalorder %s212, %s213
      %p222 = scmp.eq.s32.totalorder %s36, 0
      %p223 = por %p221, %p222
      %p224 = scmp.ne.s32.totalorder %s212, %s213
      %p225 = scmp.eq.s32.totalorder %s37, 1
      %p226 = por %p224, %p225
      %p228 = scmp.ne.s32.totalorder %s213, %s227
      %p229 = scmp.eq.s32.totalorder %s37, 0
      %p230 = por %p228, %p229
      %s232 = sadd.s32 %s231, 1
      %p235 = scmp.eq.s32.totalorder %s31, 1
      %p236 = scmp.ne.s32.totalorder %s231, %s233
      %p237 = scmp.eq.s32.totalorder %s31, 0
      %p238 = por %p236, %p237
      %p239 = scmp.ne.s32.totalorder %s231, %s233
      %p240 = scmp.eq.s32.totalorder %s36, 1
      %p241 = por %p239, %p240
      %p242 = scmp.ne.s32.totalorder %s233, %s234
      %p243 = scmp.eq.s32.totalorder %s36, 0
      %p244 = por %p242, %p243
      %p245 = scmp.ne.s32.totalorder %s233, %s234
      %p246 = scmp.eq.s32.totalorder %s37, 1
      %p247 = por %p245, %p246
      %p249 = scmp.ne.s32.totalorder %s234, %s248
      %p250 = scmp.eq.s32.totalorder %s37, 0
      %p251 = por %p249, %p250
      %s253 = sadd.s32 %s252, 1
      %p256 = scmp.eq.s32.totalorder %s31, 1
      %p257 = scmp.ne.s32.totalorder %s252, %s254
      %p258 = scmp.eq.s32.totalorder %s31, 0
      %p259 = por %p257, %p258
      %p260 = scmp.ne.s32.totalorder %s252, %s254
      %p261 = scmp.eq.s32.totalorder %s36, 1
      %p262 = por %p260, %p261
      %p263 = scmp.ne.s32.totalorder %s254, %s255
      %p264 = scmp.eq.s32.totalorder %s36, 0
      %p265 = por %p263, %p264
      %p266 = scmp.ne.s32.totalorder %s254, %s255
      %p267 = scmp.eq.s32.totalorder %s37, 1
      %p268 = por %p266, %p267
      %p270 = scmp.ne.s32.totalorder %s255, %s269
      %p271 = scmp.eq.s32.totalorder %s37, 0
      %p272 = por %p270, %p271
      %s274 = sadd.s32 %s273, 1
      %p277 = scmp.eq.s32.totalorder %s31, 1
      %p278 = scmp.ne.s32.totalorder %s273, %s275
      %p279 = scmp.eq.s32.totalorder %s31, 0
      %p280 = por %p278, %p279
      %p281 = scmp.ne.s32.totalorder %s273, %s275
      %p282 = scmp.eq.s32.totalorder %s36, 1
      %p283 = por %p281, %p282
      %p284 = scmp.ne.s32.totalorder %s275, %s276
      %p285 = scmp.eq.s32.totalorder %s36, 0
      %p286 = por %p284, %p285
      %p287 = scmp.ne.s32.totalorder %s275, %s276
      %p288 = scmp.eq.s32.totalorder %s37, 1
      %p289 = por %p287, %p288
      %p291 = scmp.ne.s32.totalorder %s276, %s290
      %p292 = scmp.eq.s32.totalorder %s37, 0
      %p293 = por %p291, %p292
      %s295 = sadd.s32 %s294, 1
      %p298 = scmp.eq.s32.totalorder %s31, 1
      %p299 = scmp.ne.s32.totalorder %s294, %s296
      %p300 = scmp.eq.s32.totalorder %s31, 0
      %p301 = por %p299, %p300
      %p302 = scmp.ne.s32.totalorder %s294, %s296
      %p303 = scmp.eq.s32.totalorder %s36, 1
      %p304 = por %p302, %p303
      %p305 = scmp.ne.s32.totalorder %s296, %s297
      %p306 = scmp.eq.s32.totalorder %s36, 0
      %p307 = por %p305, %p306
      %p308 = scmp.ne.s32.totalorder %s296, %s297
      %p309 = scmp.eq.s32.totalorder %s37, 1
      %p310 = por %p308, %p309
      %p312 = scmp.ne.s32.totalorder %s297, %s311
      %p313 = scmp.eq.s32.totalorder %s37, 0
      %p314 = por %p312, %p313
      %s316 = sadd.s32 %s315, 1
      %p319 = scmp.eq.s32.totalorder %s31, 1
      %p320 = scmp.ne.s32.totalorder %s315, %s317
      %p321 = scmp.eq.s32.totalorder %s31, 0
      %p322 = por %p320, %p321
      %p323 = scmp.ne.s32.totalorder %s315, %s317
      %p324 = scmp.eq.s32.totalorder %s36, 1
      %p325 = por %p323, %p324
      %p326 = scmp.ne.s32.totalorder %s317, %s318
      %p327 = scmp.eq.s32.totalorder %s36, 0
      %p328 = por %p326, %p327
      %p329 = scmp.ne.s32.totalorder %s317, %s318
      %p330 = scmp.eq.s32.totalorder %s37, 1
      %p331 = por %p329, %p330
      %p333 = scmp.ne.s32.totalorder %s318, %s332
      %p334 = scmp.eq.s32.totalorder %s37, 0
      %p335 = por %p333, %p334
      %s337 = sadd.s32 %s336, 1
      %p340 = scmp.eq.s32.totalorder %s31, 1
      %p341 = scmp.ne.s32.totalorder %s336, %s338
      %p342 = scmp.eq.s32.totalorder %s31, 0
      %p343 = por %p341, %p342
      %p344 = scmp.ne.s32.totalorder %s336, %s338
      %p345 = scmp.eq.s32.totalorder %s36, 1
      %p346 = por %p344, %p345
      %p347 = scmp.ne.s32.totalorder %s338, %s339
      %p348 = scmp.eq.s32.totalorder %s36, 0
      %p349 = por %p347, %p348
      %p350 = scmp.ne.s32.totalorder %s338, %s339
      %p351 = scmp.eq.s32.totalorder %s37, 1
      %p352 = por %p350, %p351
      %p354 = scmp.ne.s32.totalorder %s339, %s353
      %p355 = scmp.eq.s32.totalorder %s37, 0
      %p356 = por %p354, %p355
      %s358 = sadd.s32 %s357, 1
      %p361 = scmp.eq.s32.totalorder %s31, 1
      %p362 = scmp.ne.s32.totalorder %s357, %s359
      %p363 = scmp.eq.s32.totalorder %s31, 0
      %p364 = por %p362, %p363
      %p365 = scmp.ne.s32.totalorder %s357, %s359
      %p366 = scmp.eq.s32.totalorder %s36, 1
      %p367 = por %p365, %p366
      %p368 = scmp.ne.s32.totalorder %s359, %s360
      %p369 = scmp.eq.s32.totalorder %s36, 0
      %p370 = por %p368, %p369
      %p371 = scmp.ne.s32.totalorder %s359, %s360
      %p372 = scmp.eq.s32.totalorder %s37, 1
      %p373 = por %p371, %p372
      %p375 = scmp.ne.s32.totalorder %s360, %s374
      %p376 = scmp.eq.s32.totalorder %s37, 0
      %p377 = por %p375, %p376
      %s379 = sadd.s32 %s378, 1
      %p382 = scmp.eq.s32.totalorder %s31, 1
      %p383 = scmp.ne.s32.totalorder %s378, %s380
      %p384 = scmp.eq.s32.totalorder %s31, 0
      %p385 = por %p383, %p384
      %p386 = scmp.ne.s32.totalorder %s378, %s380
      %p387 = scmp.eq.s32.totalorder %s36, 1
      %p388 = por %p386, %p387
      %p389 = scmp.ne.s32.totalorder %s380, %s381
      %p390 = scmp.eq.s32.totalorder %s36, 0
      %p391 = por %p389, %p390
      %p392 = scmp.ne.s32.totalorder %s380, %s381
      %p393 = scmp.eq.s32.totalorder %s37, 1
      %p394 = por %p392, %p393
      %p396 = scmp.ne.s32.totalorder %s381, %s395
      %p397 = scmp.eq.s32.totalorder %s37, 0
      %p398 = por %p396, %p397
      %s400 = sadd.s32 %s399, 1
      %p403 = scmp.eq.s32.totalorder %s31, 1
      %p404 = scmp.ne.s32.totalorder %s399, %s401
      %p405 = scmp.eq.s32.totalorder %s31, 0
      %p406 = por %p404, %p405
      %p407 = scmp.ne.s32.totalorder %s399, %s401
      %p408 = scmp.eq.s32.totalorder %s36, 1
      %p409 = por %p407, %p408
      %p410 = scmp.ne.s32.totalorder %s401, %s402
      %p411 = scmp.eq.s32.totalorder %s36, 0
      %p412 = por %p410, %p411
      %p413 = scmp.ne.s32.totalorder %s401, %s402
      %p414 = scmp.eq.s32.totalorder %s37, 1
      %p415 = por %p413, %p414
      %p417 = scmp.ne.s32.totalorder %s402, %s416
      %p418 = scmp.eq.s32.totalorder %s37, 0
      %p419 = por %p417, %p418
      %s421 = sadd.s32 %s420, 1
      %p424 = scmp.eq.s32.totalorder %s31, 1
      %p425 = scmp.ne.s32.totalorder %s420, %s422
      %p426 = scmp.eq.s32.totalorder %s31, 0
      %p427 = por %p425, %p426
      %p428 = scmp.ne.s32.totalorder %s420, %s422
      %p429 = scmp.eq.s32.totalorder %s36, 1
      %p430 = por %p428, %p429
      %p431 = scmp.ne.s32.totalorder %s422, %s423
      %p432 = scmp.eq.s32.totalorder %s36, 0
      %p433 = por %p431, %p432
      %p434 = scmp.ne.s32.totalorder %s422, %s423
      %p435 = scmp.eq.s32.totalorder %s37, 1
      %p436 = por %p434, %p435
      %p438 = scmp.ne.s32.totalorder %s423, %s437
      %p439 = scmp.eq.s32.totalorder %s37, 0
      %p440 = por %p438, %p439
      %s441 = ssub.s32 %s38, %s50
      %s442 = ssub.s32 %s39, %s46
      %s443 = sor.u32 %s441, %s442
      %p444 = scmp.eq.s32.totalorder %s443, 0
      %s446 = sadd.s32 %s445, 1
      %s447 = scalar_select %p444, %s445, %s446
      %p450 = pneg %p444
      %p451 = scmp.eq.s32.totalorder %s31, 1
      %p452 = por %p450, %p451
      %p453 = scmp.ne.s32.totalorder %s445, %s448
      %p454 = scmp.eq.s32.totalorder %s31, 0
      %p455 = por %p453, %p454
      %p456 = scmp.ne.s32.totalorder %s445, %s448
      %p457 = scmp.eq.s32.totalorder %s36, 1
      %p458 = por %p456, %p457
      %p459 = scmp.ne.s32.totalorder %s448, %s449
      %p460 = scmp.eq.s32.totalorder %s36, 0
      %p461 = por %p459, %p460
      %p462 = scmp.ne.s32.totalorder %s448, %s449
      %p463 = scmp.eq.s32.totalorder %s37, 1
      %p464 = por %p462, %p463
      %p466 = scmp.ne.s32.totalorder %s449, %s465
      %p467 = scmp.eq.s32.totalorder %s37, 0
      %p468 = por %p466, %p467
      %p469 = scmp.le.s32.totalorder 1, %s31
      %p470 = scmp.lt.s32.totalorder %s31, 3
      %p471 = pnand %p469, %p470
      %p472 = pneg %p471
      // Predicated region
      $region9: #{tpu_custom_call.1} parent=5 // pred_check
        _
      $region10: #{tpu_custom_call.1} parent=5 // pred_check_branch
        %474 = sbr.rel (%p471) target = $region12
      $region11: #{tpu_custom_call.1} parent=5 // pred_region
        %s475 = ssub.s32 %s31, 1
        // Predicated region
        $region13: #{tpu_custom_call.1} parent=11 // pred_check
          %p476 = pneg %p118
        $region14: #{tpu_custom_call.1} parent=11 // pred_check_branch
          %478 = sbr.rel (%p476) target = $region16
        $region15: #{tpu_custom_call.1} parent=11 // pred_region
          _
        $region16: #{tpu_custom_call.1} parent=11 // pred_fallthru
          _
        // Predicated region
        $region17: #{tpu_custom_call.1} parent=11 // pred_check
          %p479 = pneg %p139
        $region18: #{tpu_custom_call.1} parent=11 // pred_check_branch
          %481 = sbr.rel (%p479) target = $region20
        $region19: #{tpu_custom_call.1} parent=11 // pred_region
          %s483 = ssub.s32 16, 16
          %484 = vsyncadd [#allocation6], %s483
          %s486 = sshll.u32 [#allocation5], 4
          %s487 = int_to_ptr.vmem [resolvable:$true] %s486
          %489 = dma.hbm_to_vmem [thread:$0]  %s3, 16, %s487, [#allocation6]
        $region20: #{tpu_custom_call.1} parent=11 // pred_fallthru
          _
        // Predicated region
        $region21: #{tpu_custom_call.1} parent=11 // pred_check
          %p490 = pneg %p160
        $region22: #{tpu_custom_call.1} parent=11 // pred_check_branch
          %492 = sbr.rel (%p490) target = $region24
        $region23: #{tpu_custom_call.1} parent=11 // pred_region
          _
        $region24: #{tpu_custom_call.1} parent=11 // pred_fallthru
          _
        // Predicated region
        $region25: #{tpu_custom_call.1} parent=11 // pred_check
          %p493 = pneg %p181
        $region26: #{tpu_custom_call.1} parent=11 // pred_check_branch
          %495 = sbr.rel (%p493) target = $region28
        $region27: #{tpu_custom_call.1} parent=11 // pred_region
          _
        $region28: #{tpu_custom_call.1} parent=11 // pred_fallthru
          _
        // Predicated region
        $region29: #{tpu_custom_call.1} parent=11 // pred_check
          %p496 = pneg %p202
        $region30: #{tpu_custom_call.1} parent=11 // pred_check_branch
          %498 = sbr.rel (%p496) target = $region32
        $region31: #{tpu_custom_call.1} parent=11 // pred_region
          _
        $region32: #{tpu_custom_call.1} parent=11 // pred_fallthru
          _
        // Predicated region
        $region33: #{tpu_custom_call.1} parent=11 // pred_check
          %p499 = pneg %p223
        $region34: #{tpu_custom_call.1} parent=11 // pred_check_branch
          %501 = sbr.rel (%p499) target = $region36
        $region35: #{tpu_custom_call.1} parent=11 // pred_region
          %s503 = ssub.s32 16, 16
          %504 = vsyncadd [#allocation9], %s503
          %s506 = sshll.u32 [#allocation8], 4
          %s507 = int_to_ptr.vmem [resolvable:$true] %s506
          %509 = dma.hbm_to_vmem [thread:$0]  %s7, 16, %s507, [#allocation9]
        $region36: #{tpu_custom_call.1} parent=11 // pred_fallthru
          _
        // Predicated region
        $region37: #{tpu_custom_call.1} parent=11 // pred_check
          %p510 = pneg %p244
        $region38: #{tpu_custom_call.1} parent=11 // pred_check_branch
          %512 = sbr.rel (%p510) target = $region40
        $region39: #{tpu_custom_call.1} parent=11 // pred_region
          %s514 = ssub.s32 16, 16
          %515 = vsyncadd [#allocation9], %s514
          %s517 = sshll.u32 [#allocation10], 4
          %s518 = int_to_ptr.vmem [resolvable:$true] %s517
          %520 = dma.hbm_to_vmem [thread:$0]  %s8, 16, %s518, [#allocation9]
        $region40: #{tpu_custom_call.1} parent=11 // pred_fallthru
          _
        // Predicated region
        $region41: #{tpu_custom_call.1} parent=11 // pred_check
          %p521 = pneg %p265
        $region42: #{tpu_custom_call.1} parent=11 // pred_check_branch
          %523 = sbr.rel (%p521) target = $region44
        $region43: #{tpu_custom_call.1} parent=11 // pred_region
          %s525 = ssub.s32 16, 16
          %526 = vsyncadd [#allocation12], %s525
          %s528 = sshll.u32 [#allocation11], 4
          %s529 = int_to_ptr.vmem [resolvable:$true] %s528
          %531 = dma.hbm_to_vmem [thread:$0]  %s9, 16, %s529, [#allocation12]
        $region44: #{tpu_custom_call.1} parent=11 // pred_fallthru
          _
        // Predicated region
        $region45: #{tpu_custom_call.1} parent=11 // pred_check
          %p532 = pneg %p286
        $region46: #{tpu_custom_call.1} parent=11 // pred_check_branch
          %534 = sbr.rel (%p532) target = $region48
        $region47: #{tpu_custom_call.1} parent=11 // pred_region
          _
        $region48: #{tpu_custom_call.1} parent=11 // pred_fallthru
          _
        // Predicated region
        $region49: #{tpu_custom_call.1} parent=11 // pred_check
          %p535 = pneg %p307
        $region50: #{tpu_custom_call.1} parent=11 // pred_check_branch
          %537 = sbr.rel (%p535) target = $region52
        $region51: #{tpu_custom_call.1} parent=11 // pred_region
          %s539 = ssub.s32 16, 16
          %540 = vsyncadd [#allocation12], %s539
          %s542 = sshll.u32 [#allocation13], 4
          %s543 = int_to_ptr.vmem [resolvable:$true] %s542
          %545 = dma.hbm_to_vmem [thread:$0]  %s11, 16, %s543, [#allocation12]
        $region52: #{tpu_custom_call.1} parent=11 // pred_fallthru
          _
        // Predicated region
        $region53: #{tpu_custom_call.1} parent=11 // pred_check
          %p546 = pneg %p328
        $region54: #{tpu_custom_call.1} parent=11 // pred_check_branch
          %548 = sbr.rel (%p546) target = $region56
        $region55: #{tpu_custom_call.1} parent=11 // pred_region
          %s550 = ssub.s32 16, 16
          %551 = vsyncadd [#allocation15], %s550
          %s553 = sshll.u32 [#allocation14], 4
          %s554 = int_to_ptr.vmem [resolvable:$true] %s553
          %556 = dma.hbm_to_vmem [thread:$0]  %s12, 16, %s554, [#allocation15]
        $region56: #{tpu_custom_call.1} parent=11 // pred_fallthru
          _
        // Predicated region
        $region57: #{tpu_custom_call.1} parent=11 // pred_check
          %p557 = pneg %p349
        $region58: #{tpu_custom_call.1} parent=11 // pred_check_branch
          %559 = sbr.rel (%p557) target = $region60
        $region59: #{tpu_custom_call.1} parent=11 // pred_region
          %s561 = ssub.s32 16, 16
          %562 = vsyncadd [#allocation15], %s561
          %s564 = sshll.u32 [#allocation16], 4
          %s565 = int_to_ptr.vmem [resolvable:$true] %s564
          %567 = dma.hbm_to_vmem [thread:$0]  %s13, 16, %s565, [#allocation15]
        $region60: #{tpu_custom_call.1} parent=11 // pred_fallthru
          _
        // Predicated region
        $region61: #{tpu_custom_call.1} parent=11 // pred_check
          %p568 = pneg %p370
        $region62: #{tpu_custom_call.1} parent=11 // pred_check_branch
          %570 = sbr.rel (%p568) target = $region64
        $region63: #{tpu_custom_call.1} parent=11 // pred_region
          _
        $region64: #{tpu_custom_call.1} parent=11 // pred_fallthru
          _
        // Predicated region
        $region65: #{tpu_custom_call.1} parent=11 // pred_check
          %p571 = pneg %p391
        $region66: #{tpu_custom_call.1} parent=11 // pred_check_branch
          %573 = sbr.rel (%p571) target = $region68
        $region67: #{tpu_custom_call.1} parent=11 // pred_region
          _
        $region68: #{tpu_custom_call.1} parent=11 // pred_fallthru
          _
        // Predicated region
        $region69: #{tpu_custom_call.1} parent=11 // pred_check
          %p574 = pneg %p412
        $region70: #{tpu_custom_call.1} parent=11 // pred_check_branch
          %576 = sbr.rel (%p574) target = $region72
        $region71: #{tpu_custom_call.1} parent=11 // pred_region
          _
        $region72: #{tpu_custom_call.1} parent=11 // pred_fallthru
          _
        // Predicated region
        $region73: #{tpu_custom_call.1} parent=11 // pred_check
          %p577 = pneg %p433
        $region74: #{tpu_custom_call.1} parent=11 // pred_check_branch
          %579 = sbr.rel (%p577) target = $region76
        $region75: #{tpu_custom_call.1} parent=11 // pred_region
          _
        $region76: #{tpu_custom_call.1} parent=11 // pred_fallthru
          _
      $region12: #{tpu_custom_call.1} parent=5 // pred_fallthru
        _
      %p580 = scmp.lt.s32.totalorder %s31, 2
      // Predicated region
      $region77: #{tpu_custom_call.1} parent=5 // pred_check
        %p581 = pneg %p580
      $region78: #{tpu_custom_call.1} parent=5 // pred_check_branch
        %583 = sbr.rel (%p581) target = $region80
      $region79: #{tpu_custom_call.1} parent=5 // pred_region
        // Predicated region
        $region81: #{tpu_custom_call.1} parent=79 // pred_check
          %p584 = pneg %p63
        $region82: #{tpu_custom_call.1} parent=79 // pred_check_branch
          %586 = sbr.rel (%p584) target = $region84
        $region83: #{tpu_custom_call.1} parent=79 // pred_region
          %p587 = scmp.lt.s32.totalorder %s38, 1
          %s588 = scalar_select %p587, %s38, 1
          %s589 = smul.addr %s588, 8
          %s590 = scalar_lea.vmem %s0, %s589
        $region84: #{tpu_custom_call.1} parent=79 // pred_fallthru
          _
        // Predicated region
        $region85: #{tpu_custom_call.1} parent=79 // pred_check
          %p591 = pneg %p91
        $region86: #{tpu_custom_call.1} parent=79 // pred_check_branch
          %593 = sbr.rel (%p591) target = $region88
        $region87: #{tpu_custom_call.1} parent=79 // pred_region
          %p594 = scmp.lt.s32.totalorder %s38, 1
          %s595 = scalar_select %p594, %s38, 1
          %p596 = scmp.lt.s32.totalorder %s39, 0
          %s597 = scalar_select %p596, %s39, 0
          %s598 = sadd.s32 %s597, %s595
          %s599 = smul.addr %s598, 8
          %s600 = scalar_lea.vmem %s1, %s599
        $region88: #{tpu_custom_call.1} parent=79 // pred_fallthru
          _
      $region80: #{tpu_custom_call.1} parent=5 // pred_fallthru
        _
      %p601 = scmp.le.s32.totalorder 1, %s31
      %p602 = scmp.lt.s32.totalorder %s31, 3
      %p603 = pnand %p601, %p602
      %p604 = pneg %p603
      // Predicated region
      $region89: #{tpu_custom_call.1} parent=5 // pred_check
        _
      $region90: #{tpu_custom_call.1} parent=5 // pred_check_branch
        %606 = sbr.rel (%p603) target = $region92
      $region91: #{tpu_custom_call.1} parent=5 // pred_region
        %s607 = ssub.s32 %s31, 1
        // Predicated region
        $region93: #{tpu_custom_call.1} parent=91 // pred_check
          %p608 = pneg %p139
        $region94: #{tpu_custom_call.1} parent=91 // pred_check_branch
          %610 = sbr.rel (%p608) target = $region96
        $region95: #{tpu_custom_call.1} parent=91 // pred_region
          %611 = dma.done [#allocation6], 16
        $region96: #{tpu_custom_call.1} parent=91 // pred_fallthru
          _
        // Predicated region
        $region97: #{tpu_custom_call.1} parent=91 // pred_check
          %p612 = pneg %p223
        $region98: #{tpu_custom_call.1} parent=91 // pred_check_branch
          %614 = sbr.rel (%p612) target = $region100
        $region99: #{tpu_custom_call.1} parent=91 // pred_region
          %615 = dma.done [#allocation9], 16
        $region100: #{tpu_custom_call.1} parent=91 // pred_fallthru
          _
        // Predicated region
        $region101: #{tpu_custom_call.1} parent=91 // pred_check
          %p616 = pneg %p244
        $region102: #{tpu_custom_call.1} parent=91 // pred_check_branch
          %618 = sbr.rel (%p616) target = $region104
        $region103: #{tpu_custom_call.1} parent=91 // pred_region
          %619 = dma.done [#allocation9], 16
        $region104: #{tpu_custom_call.1} parent=91 // pred_fallthru
          _
        // Predicated region
        $region105: #{tpu_custom_call.1} parent=91 // pred_check
          %p620 = pneg %p265
        $region106: #{tpu_custom_call.1} parent=91 // pred_check_branch
          %622 = sbr.rel (%p620) target = $region108
        $region107: #{tpu_custom_call.1} parent=91 // pred_region
          %623 = dma.done [#allocation12], 16
        $region108: #{tpu_custom_call.1} parent=91 // pred_fallthru
          _
        // Predicated region
        $region109: #{tpu_custom_call.1} parent=91 // pred_check
          %p624 = pneg %p307
        $region110: #{tpu_custom_call.1} parent=91 // pred_check_branch
          %626 = sbr.rel (%p624) target = $region112
        $region111: #{tpu_custom_call.1} parent=91 // pred_region
          %627 = dma.done [#allocation12], 16
        $region112: #{tpu_custom_call.1} parent=91 // pred_fallthru
          _
        // Predicated region
        $region113: #{tpu_custom_call.1} parent=91 // pred_check
          %p628 = pneg %p328
        $region114: #{tpu_custom_call.1} parent=91 // pred_check_branch
          %630 = sbr.rel (%p628) target = $region116
        $region115: #{tpu_custom_call.1} parent=91 // pred_region
          %631 = dma.done [#allocation15], 16
        $region116: #{tpu_custom_call.1} parent=91 // pred_fallthru
          _
        // Predicated region
        $region117: #{tpu_custom_call.1} parent=91 // pred_check
          %p632 = pneg %p349
        $region118: #{tpu_custom_call.1} parent=91 // pred_check_branch
          %634 = sbr.rel (%p632) target = $region120
        $region119: #{tpu_custom_call.1} parent=91 // pred_region
          %635 = dma.done [#allocation15], 16
        $region120: #{tpu_custom_call.1} parent=91 // pred_fallthru
          _
        %p636 = scmp.lt.s32.totalorder %s40, 1
        %s637 = scalar_select %p636, %s40, 1
        %s638 = smul.addr %s637, 8
        %s639 = scalar_lea.vmem %s0, %s638
        %p640 = pneg %p69
        %p641 = pneg %p66
        %p642 = scmp.lt.s32.totalorder %s40, 1
        %s643 = scalar_select %p642, %s40, 1
        %p644 = scmp.lt.s32.totalorder %s41, 0
        %s645 = scalar_select %p644, %s41, 0
        %s646 = sadd.s32 %s645, %s643
        %s647 = smul.addr %s646, 8
        %s648 = scalar_lea.vmem %s1, %s647
        %p649 = pneg %p97
        %p650 = pneg %p94
        %p651 = pneg %p118
        %p652 = pneg %p115
        %p653 = pneg %p139
        %p654 = pneg %p136
        %p655 = pneg %p160
        %p656 = pneg %p157
        %p657 = pneg %p181
        %p658 = pneg %p178
        %p659 = pneg %p202
        %p660 = pneg %p199
        %p661 = pneg %p223
        %p662 = pneg %p220
        %p663 = pneg %p244
        %p664 = pneg %p241
        %p665 = pneg %p265
        %p666 = pneg %p262
        %p667 = pneg %p286
        %p668 = pneg %p283
        %p669 = pneg %p307
        %p670 = pneg %p304
        %p671 = pneg %p328
        %p672 = pneg %p325
        %p673 = pneg %p349
        %p674 = pneg %p346
        %p675 = pneg %p370
        %p676 = pneg %p367
        %p677 = pneg %p391
        %p678 = pneg %p388
        %p679 = pneg %p412
        %p680 = pneg %p409
        %p681 = pneg %p433
        %p682 = pneg %p430
        %p683 = pneg %p461
        %p684 = pneg %p458
        %s685 = sand.u32 %s448, 1
        %s686 = scalar_lea.sflag [#allocation7], %s685
        %s687 = sand.u32 %s448, 1
        %s688 = smul.addr %s687, 8
        %s689 = scalar_lea.vmem [#allocation17], %s688
        %p690 = scmp.lt.s32.totalorder %s40, 1
        %s691 = scalar_select %p690, %s40, 1
        %s692 = smul.addr %s691, 8
        %s693 = scalar_lea.vmem %s0, %s692
        %p694 = scmp.lt.s32.totalorder %s40, 1
        %s695 = scalar_select %p694, %s40, 1
        %p696 = scmp.lt.s32.totalorder %s41, 0
        %s697 = scalar_select %p696, %s41, 0
        %s698 = sadd.s32 %s697, %s695
        %s699 = smul.addr %s698, 8
        %s700 = scalar_lea.vmem %s1, %s699
        %p702 = scmp.eq.s32.totalorder %s41, 0
        // Predicated region
        $region121: #{tpu_custom_call.1} parent=91 // pred_check
          %p703 = pneg %p702
        $region122: #{tpu_custom_call.1} parent=91 // pred_check_branch
          %705 = sbr.rel (%p703) target = $region124
        $region123: #{tpu_custom_call.1} parent=91 // pred_region
          %v706 = vld [vmem:[%s693] sm:$0xff]
          %v707 = vld [vmem:[%s2] sm:$0x1]
          %v708 = vld [vmem:[#allocation5] sm:$0x1]
          %vm709 = vcmask 261120
          %v710 = vsel %vm709, %v706, 0.0
          %711 = vadd.xlane.f32.xlu0 %v710
          %v712 = vpop.xlane.xlu0 %711
          %v713 = vrcp.pop 32.0
          %v714 = vmul.f32 %v712, %v713
          %v715 = vsub.f32 %v706, %v714
          %v716 = vmul.f32 %v715, %v715
          %v717 = vsel %vm709, %v716, 0.0
          %718 = vadd.xlane.f32.xlu0 %v717
          %v719 = vpop.xlane.xlu0 %718
          %v720 = vmul.f32 %v719, %v713
          %v721 = vadd.f32 %v720, 1e-05
          %v722 = vrsqrt.pop %v721
          %v723 = vmul.f32 %v715, %v722
          %v725 = vlaneseq
          %v726 = vshrl.u32 %v725, 7
          %v727 = vsub.s32 0, %v726
          %v728 = vrot.slane %v707, %v727
          %v730 = vmul.f32 %v723, %v728
          %v732 = vlaneseq
          %v733 = vshrl.u32 %v732, 7
          %v734 = vsub.s32 0, %v733
          %v735 = vrot.slane %v708, %v734
          %v737 = vadd.f32 %v730, %v735
          %v738 = vpack.c.bf16 %v737, %v737
          %v739 = vld [vmem:[%s4] sm:$0xf]
          %v740 = vld [vmem:[%s4 + $0x4] sm:$0xf]
          %v741 = vld [vmem:[%s4 + $0x8] sm:$0xf]
          %v742 = vld [vmem:[%s4 + $0xc] sm:$0xf]
          %v743 = vld [vmem:[#allocation8] sm:$0x1]
          %v745 = vlaneseq
          %v746 = vshrl.u32 %v745, 7
          %v747 = vsub.s32 0, %v746
          %v748 = vrot.slane %v743, %v747
          %v754 = vunpack.c.l.b16 %v739
          %v755 = vunpack.c.l.b16 %v740
          %v756 = vunpack.c.l.b16 %v741
          %v757 = vunpack.c.l.b16 %v742
          %v758 = vpack.c.b16 %v755, %v754
          %v759 = vpack.c.b16 %v757, %v756
          %v763 = vsel %vm709, %v738, 0
          %765 = vmatprep.subr.bf16.mxu0 0
          %766 = vmatpush1.bf16.msra.mxu0 %v758
          %767 = vmatprep.subr.bf16.mxu0 0
          %768 = vmatpush1.bf16.msra.mxu0 %v759
          %769 = vmatprep.subr.bf16.mxu0 0
          %770 = vmatpush1.bf16.msra.mxu0 0
          %771 = vmatprep.subr.bf16.mxu0 0
          %772 = vmatpush1.bf16.msra.mxu0 0
          %773 = vmatprep.subr.bf16.mxu0 0
          %774 = vmatpush1.bf16.msra.mxu0 0
          %775 = vmatprep.subr.bf16.mxu0 0
          %776 = vmatpush1.bf16.msra.mxu0 0
          %777 = vmatprep.subr.bf16.mxu0 0
          %778 = vmatpush1.bf16.msra.mxu0 0
          %779 = vmatprep.subr.bf16.mxu0 0
          %780 = vmatpush1.bf16.msra.mxu0 0
          %781 = vmatprep.subr.bf16.mxu0 0
          %782 = vmatpush1.bf16.msra.mxu0 0
          %783 = vmatprep.subr.bf16.mxu0 0
          %784 = vmatpush1.bf16.msra.mxu0 0
          %785 = vmatprep.subr.bf16.mxu0 0
          %786 = vmatpush1.bf16.msra.mxu0 0
          %787 = vmatprep.subr.bf16.mxu0 0
          %788 = vmatpush1.bf16.msra.mxu0 0
          %789 = vmatprep.subr.bf16.mxu0 0
          %790 = vmatpush1.bf16.msra.mxu0 0
          %791 = vmatprep.subr.bf16.mxu0 0
          %792 = vmatpush1.bf16.msra.mxu0 0
          %793 = vmatprep.subr.bf16.mxu0 0
          %794 = vmatpush1.bf16.msra.mxu0 0
          %795 = vmatprep.subr.bf16.mxu0 0
          %796 = vmatpush1.bf16.msra.mxu0 0
          %797 = vmatprep.mubr.bf16.mxu0 0
          %798 = vmatmul.mubr.bf16.gmra.mrb[0].mxu0 %v763
          %v799 = vpop.f32.mrb[0].mxu0
          %v800 = vadd.f32 %v748, %v799
          %v801 = vpop.f32.mrb[0].mxu0
          %v802 = vpop.f32.mrb[0].mxu0
          %v803 = vpop.f32.mrb[0].mxu0
          %804 = vdwg.mxu0
          %v805 = vpack.c.bf16 %v800, %v800
          %v806 = vld [vmem:[%s5] sm:$0xf]
          %v807 = vld [vmem:[%s5 + $0x4] sm:$0xf]
          %v808 = vld [vmem:[%s5 + $0x8] sm:$0xf]
          %v809 = vld [vmem:[%s5 + $0xc] sm:$0xf]
          %v810 = vld [vmem:[#allocation10] sm:$0x1]
          %v812 = vlaneseq
          %v813 = vshrl.u32 %v812, 7
          %v814 = vsub.s32 0, %v813
          %v815 = vrot.slane %v810, %v814
          %v821 = vunpack.c.l.b16 %v806
          %v822 = vunpack.c.l.b16 %v807
          %v823 = vunpack.c.l.b16 %v808
          %v824 = vunpack.c.l.b16 %v809
          %v825 = vpack.c.b16 %v822, %v821
          %v826 = vpack.c.b16 %v824, %v823
          %829 = vmatprep.subr.bf16.mxu0 0
          %830 = vmatpush1.bf16.msra.mxu0 %v825
          %831 = vmatprep.subr.bf16.mxu0 0
          %832 = vmatpush1.bf16.msra.mxu0 %v826
          %833 = vmatprep.subr.bf16.mxu0 0
          %834 = vmatpush1.bf16.msra.mxu0 0
          %835 = vmatprep.subr.bf16.mxu0 0
          %836 = vmatpush1.bf16.msra.mxu0 0
          %837 = vmatprep.subr.bf16.mxu0 0
          %838 = vmatpush1.bf16.msra.mxu0 0
          %839 = vmatprep.subr.bf16.mxu0 0
          %840 = vmatpush1.bf16.msra.mxu0 0
          %841 = vmatprep.subr.bf16.mxu0 0
          %842 = vmatpush1.bf16.msra.mxu0 0
          %843 = vmatprep.subr.bf16.mxu0 0
          %844 = vmatpush1.bf16.msra.mxu0 0
          %845 = vmatprep.subr.bf16.mxu0 0
          %846 = vmatpush1.bf16.msra.mxu0 0
          %847 = vmatprep.subr.bf16.mxu0 0
          %848 = vmatpush1.bf16.msra.mxu0 0
          %849 = vmatprep.subr.bf16.mxu0 0
          %850 = vmatpush1.bf16.msra.mxu0 0
          %851 = vmatprep.subr.bf16.mxu0 0
          %852 = vmatpush1.bf16.msra.mxu0 0
          %853 = vmatprep.subr.bf16.mxu0 0
          %854 = vmatpush1.bf16.msra.mxu0 0
          %855 = vmatprep.subr.bf16.mxu0 0
          %856 = vmatpush1.bf16.msra.mxu0 0
          %857 = vmatprep.subr.bf16.mxu0 0
          %858 = vmatpush1.bf16.msra.mxu0 0
          %859 = vmatprep.subr.bf16.mxu0 0
          %860 = vmatpush1.bf16.msra.mxu0 0
          %861 = vmatprep.mubr.bf16.mxu0 0
          %862 = vmatmul.mubr.bf16.gmra.mrb[0].mxu0 %v763
          %v863 = vpop.f32.mrb[0].mxu0
          %v864 = vadd.f32 %v815, %v863
          %v865 = vpop.f32.mrb[0].mxu0
          %v866 = vpop.f32.mrb[0].mxu0
          %v867 = vpop.f32.mrb[0].mxu0
          %868 = vdwg.mxu0
          %v869 = vpack.c.bf16 %v864, %v864
          %v870 = vld [vmem:[%s6] sm:$0xf]
          %v871 = vld [vmem:[%s6 + $0x4] sm:$0xf]
          %v872 = vld [vmem:[%s6 + $0x8] sm:$0xf]
          %v873 = vld [vmem:[%s6 + $0xc] sm:$0xf]
          %v874 = vld [vmem:[#allocation11] sm:$0x1]
          %v876 = vlaneseq
          %v877 = vshrl.u32 %v876, 7
          %v878 = vsub.s32 0, %v877
          %v879 = vrot.slane %v874, %v878
          %v885 = vunpack.c.l.b16 %v870
          %v886 = vunpack.c.l.b16 %v871
          %v887 = vunpack.c.l.b16 %v872
          %v888 = vunpack.c.l.b16 %v873
          %v889 = vpack.c.b16 %v886, %v885
          %v890 = vpack.c.b16 %v888, %v887
          %893 = vmatprep.subr.bf16.mxu0 0
          %894 = vmatpush1.bf16.msra.mxu0 %v889
          %895 = vmatprep.subr.bf16.mxu0 0
          %896 = vmatpush1.bf16.msra.mxu0 %v890
          %897 = vmatprep.subr.bf16.mxu0 0
          %898 = vmatpush1.bf16.msra.mxu0 0
          %899 = vmatprep.subr.bf16.mxu0 0
          %900 = vmatpush1.bf16.msra.mxu0 0
          %901 = vmatprep.subr.bf16.mxu0 0
          %902 = vmatpush1.bf16.msra.mxu0 0
          %903 = vmatprep.subr.bf16.mxu0 0
          %904 = vmatpush1.bf16.msra.mxu0 0
          %905 = vmatprep.subr.bf16.mxu0 0
          %906 = vmatpush1.bf16.msra.mxu0 0
          %907 = vmatprep.subr.bf16.mxu0 0
          %908 = vmatpush1.bf16.msra.mxu0 0
          %909 = vmatprep.subr.bf16.mxu0 0
          %910 = vmatpush1.bf16.msra.mxu0 0
          %911 = vmatprep.subr.bf16.mxu0 0
          %912 = vmatpush1.bf16.msra.mxu0 0
          %913 = vmatprep.subr.bf16.mxu0 0
          %914 = vmatpush1.bf16.msra.mxu0 0
          %915 = vmatprep.subr.bf16.mxu0 0
          %916 = vmatpush1.bf16.msra.mxu0 0
          %917 = vmatprep.subr.bf16.mxu0 0
          %918 = vmatpush1.bf16.msra.mxu0 0
          %919 = vmatprep.subr.bf16.mxu0 0
          %920 = vmatpush1.bf16.msra.mxu0 0
          %921 = vmatprep.subr.bf16.mxu0 0
          %922 = vmatpush1.bf16.msra.mxu0 0
          %923 = vmatprep.subr.bf16.mxu0 0
          %924 = vmatpush1.bf16.msra.mxu0 0
          %925 = vmatprep.mubr.bf16.mxu0 0
          %926 = vmatmul.mubr.bf16.gmra.mrb[0].mxu0 %v763
          %v927 = vpop.f32.mrb[0].mxu0
          %v928 = vadd.f32 %v879, %v927
          %v929 = vpop.f32.mrb[0].mxu0
          %v930 = vpop.f32.mrb[0].mxu0
          %v931 = vpop.f32.mrb[0].mxu0
          %932 = vdwg.mxu0
          %v933 = vpack.c.bf16 %v928, %v928
          %vm934 = vcmask 60416
          %935 = vst.msk [vmem:[#allocation2] sm:$0xf] %vm934, %v805
          %936 = vst.msk [vmem:[#allocation3] sm:$0xf] %vm934, %v869
          %937 = vst.msk [vmem:[#allocation4] sm:$0xf] %vm934, %v933
          %v939 = vunpack.c.l.b16 %v805
          %v940 = vpack.c.b16 %v939, %v939
          %941 = vrot.lane.b32.xlu0 %v940, 120
          %v942 = vpop.permute.xlu0 %941
          %s944 = scalar_lea.vmem [#allocation2], 4
          %945 = vst.msk [vmem:[%s944] sm:$0xf] %vm934, %v942
          %v947 = vunpack.c.l.b16 %v869
          %v948 = vpack.c.b16 %v947, %v947
          %949 = vrot.lane.b32.xlu0 %v948, 120
          %v950 = vpop.permute.xlu0 %949
          %s952 = scalar_lea.vmem [#allocation3], 4
          %953 = vst.msk [vmem:[%s952] sm:$0xf] %vm934, %v950
          %v955 = vunpack.c.l.b16 %v933
          %v956 = vpack.c.b16 %v955, %v955
          %957 = vrot.lane.b32.xlu0 %v956, 120
          %v958 = vpop.permute.xlu0 %957
          %s960 = scalar_lea.vmem [#allocation4], 4
          %961 = vst.msk [vmem:[%s960] sm:$0xf] %vm934, %v958
          %962 = vrot.lane.b32.xlu0 %v940, 112
          %v963 = vpop.permute.xlu0 %962
          %s965 = scalar_lea.vmem [#allocation2], 8
          %966 = vst.msk [vmem:[%s965] sm:$0xf] %vm934, %v963
          %967 = vrot.lane.b32.xlu0 %v948, 112
          %v968 = vpop.permute.xlu0 %967
          %s970 = scalar_lea.vmem [#allocation3], 8
          %971 = vst.msk [vmem:[%s970] sm:$0xf] %vm934, %v968
          %972 = vrot.lane.b32.xlu0 %v956, 112
          %v973 = vpop.permute.xlu0 %972
          %s975 = scalar_lea.vmem [#allocation4], 8
          %976 = vst.msk [vmem:[%s975] sm:$0xf] %vm934, %v973
          %977 = vrot.lane.b32.xlu0 %v940, 104
          %v978 = vpop.permute.xlu0 %977
          %s980 = scalar_lea.vmem [#allocation2], 12
          %981 = vst.msk [vmem:[%s980] sm:$0xf] %vm934, %v978
          %982 = vrot.lane.b32.xlu0 %v948, 104
          %v983 = vpop.permute.xlu0 %982
          %s985 = scalar_lea.vmem [#allocation3], 12
          %986 = vst.msk [vmem:[%s985] sm:$0xf] %vm934, %v983
          %987 = vrot.lane.b32.xlu0 %v956, 104
          %v988 = vpop.permute.xlu0 %987
          %s990 = scalar_lea.vmem [#allocation4], 12
          %991 = vst.msk [vmem:[%s990] sm:$0xf] %vm934, %v988
        $region124: #{tpu_custom_call.1} parent=91 // pred_fallthru
          _
        %v992 = vld [vmem:[%s700] sm:$0xff]
        %s993 = smul.u32 %s41, 8
        %s994 = sshra.s32 %s993, 3
        %s995 = sand.u32 %s993, 7
        %s996 = smul.addr %s994, 4
        %s997 = scalar_lea.vmem [#allocation2], %s996
        %v998 = vld [vmem:[%s997] sm:$0xf]
        %v999 = vld [vmem:[%s997 + $0x4] sm:$0xf]
        %v1000 = vld [vmem:[%s997 + $0x8] sm:$0xf]
        %v1001 = vld [vmem:[%s997 + $0xc] sm:$0xf]
        %v1002 = vld [vmem:[#allocation3] sm:$0xf]
        %v1003 = vld [vmem:[#allocation3 + $0x4] sm:$0xf]
        %v1004 = vld [vmem:[#allocation3 + $0x8] sm:$0xf]
        %v1005 = vld [vmem:[#allocation3 + $0xc] sm:$0xf]
        %vm1006 = vcmask 64512
        %v1008 = vsel %vm1006, %v998, 0
        %v1011 = vsel %vm1006, %v1002, 0
        %1013 = vmatprep.subr.bf16.mxu0 0
        %1014 = vmatpush1.bf16.xpose.msra.mxu0 %v1011
        %1015 = vmatprep.subr.bf16.mxu0 0
        %1016 = vmatpush1.bf16.xpose.msra.mxu0 0
        %1017 = vmatprep.subr.bf16.mxu0 0
        %1018 = vmatpush1.bf16.xpose.msra.mxu0 0
        %1019 = vmatprep.subr.bf16.mxu0 0
        %1020 = vmatpush1.bf16.xpose.msra.mxu0 0
        %1021 = vmatprep.subr.bf16.mxu0 0
        %1022 = vmatpush1.bf16.xpose.msra.mxu0 0
        %1023 = vmatprep.subr.bf16.mxu0 0
        %1024 = vmatpush1.bf16.xpose.msra.mxu0 0
        %1025 = vmatprep.subr.bf16.mxu0 0
        %1026 = vmatpush1.bf16.xpose.msra.mxu0 0
        %1027 = vmatprep.subr.bf16.mxu0 0
        %1028 = vmatpush1.bf16.xpose.msra.mxu0 0
        %1029 = vmatprep.subr.bf16.mxu0 0
        %1030 = vmatpush1.bf16.xpose.msra.mxu0 0
        %1031 = vmatprep.subr.bf16.mxu0 0
        %1032 = vmatpush1.bf16.xpose.msra.mxu0 0
        %1033 = vmatprep.subr.bf16.mxu0 0
        %1034 = vmatpush1.bf16.xpose.msra.mxu0 0
        %1035 = vmatprep.subr.bf16.mxu0 0
        %1036 = vmatpush1.bf16.xpose.msra.mxu0 0
        %1037 = vmatprep.subr.bf16.mxu0 0
        %1038 = vmatpush1.bf16.xpose.msra.mxu0 0
        %1039 = vmatprep.subr.bf16.mxu0 0
        %1040 = vmatpush1.bf16.xpose.msra.mxu0 0
        %1041 = vmatprep.subr.bf16.mxu0 0
        %1042 = vmatpush1.bf16.xpose.msra.mxu0 0
        %1043 = vmatprep.subr.bf16.mxu0 0
        %1044 = vmatpush1.bf16.xpose.msra.mxu0 0
        %1045 = vmatprep.mubr.bf16.mxu0 0
        %1046 = vmatmul.mubr.bf16.gmra.mrb[0].mxu0 %v1008
        %v1047 = vpop.f32.mrb[0].mxu0
        %v1048 = vadd.f32 0.0, %v1047
        %v1049 = vpop.f32.mrb[0].mxu0
        %v1050 = vpop.f32.mrb[0].mxu0
        %v1051 = vpop.f32.mrb[0].mxu0
        %1052 = vdwg.mxu0
        %v1054 = vsel %vm1006, %v999, 0
        %v1057 = vsel %vm1006, %v1003, 0
        %1059 = vmatprep.subr.bf16.mxu0 0
        %1060 = vmatpush1.bf16.xpose.msra.mxu0 %v1057
        %1061 = vmatprep.subr.bf16.mxu0 0
        %1062 = vmatpush1.bf16.xpose.msra.mxu0 0
        %1063 = vmatprep.subr.bf16.mxu0 0
        %1064 = vmatpush1.bf16.xpose.msra.mxu0 0
        %1065 = vmatprep.subr.bf16.mxu0 0
        %1066 = vmatpush1.bf16.xpose.msra.mxu0 0
        %1067 = vmatprep.subr.bf16.mxu0 0
        %1068 = vmatpush1.bf16.xpose.msra.mxu0 0
        %1069 = vmatprep.subr.bf16.mxu0 0
        %1070 = vmatpush1.bf16.xpose.msra.mxu0 0
        %1071 = vmatprep.subr.bf16.mxu0 0
        %1072 = vmatpush1.bf16.xpose.msra.mxu0 0
        %1073 = vmatprep.subr.bf16.mxu0 0
        %1074 = vmatpush1.bf16.xpose.msra.mxu0 0
        %1075 = vmatprep.subr.bf16.mxu0 0
        %1076 = vmatpush1.bf16.xpose.msra.mxu0 0
        %1077 = vmatprep.subr.bf16.mxu0 0
        %1078 = vmatpush1.bf16.xpose.msra.mxu0 0
        %1079 = vmatprep.subr.bf16.mxu0 0
        %1080 = vmatpush1.bf16.xpose.msra.mxu0 0
        %1081 = vmatprep.subr.bf16.mxu0 0
        %1082 = vmatpush1.bf16.xpose.msra.mxu0 0
        %1083 = vmatprep.subr.bf16.mxu0 0
        %1084 = vmatpush1.bf16.xpose.msra.mxu0 0
        %1085 = vmatprep.subr.bf16.mxu0 0
        %1086 = vmatpush1.bf16.xpose.msra.mxu0 0
        %1087 = vmatprep.subr.bf16.mxu0 0
        %1088 = vmatpush1.bf16.xpose.msra.mxu0 0
        %1089 = vmatprep.subr.bf16.mxu0 0
        %1090 = vmatpush1.bf16.xpose.msra.mxu0 0
        %1091 = vmatprep.mubr.bf16.mxu0 0
        %1092 = vmatmul.mubr.bf16.gmra.mrb[0].mxu0 %v1054
        %v1093 = vpop.f32.mrb[0].mxu0
        %v1094 = vadd.f32 0.0, %v1093
        %v1095 = vpop.f32.mrb[0].mxu0
        %v1096 = vpop.f32.mrb[0].mxu0
        %v1097 = vpop.f32.mrb[0].mxu0
        %1098 = vdwg.mxu0
        %v1100 = vsel %vm1006, %v1000, 0
        %v1103 = vsel %vm1006, %v1004, 0
        %1105 = vmatprep.subr.bf16.mxu0 0
        %1106 = vmatpush1.bf16.xpose.msra.mxu0 %v1103
        %1107 = vmatprep.subr.bf16.mxu0 0
        %1108 = vmatpush1.bf16.xpose.msra.mxu0 0
        %1109 = vmatprep.subr.bf16.mxu0 0
        %1110 = vmatpush1.bf16.xpose.msra.mxu0 0
        %1111 = vmatprep.subr.bf16.mxu0 0
        %1112 = vmatpush1.bf16.xpose.msra.mxu0 0
        %1113 = vmatprep.subr.bf16.mxu0 0
        %1114 = vmatpush1.bf16.xpose.msra.mxu0 0
        %1115 = vmatprep.subr.bf16.mxu0 0
        %1116 = vmatpush1.bf16.xpose.msra.mxu0 0
        %1117 = vmatprep.subr.bf16.mxu0 0
        %1118 = vmatpush1.bf16.xpose.msra.mxu0 0
        %1119 = vmatprep.subr.bf16.mxu0 0
        %1120 = vmatpush1.bf16.xpose.msra.mxu0 0
        %1121 = vmatprep.subr.bf16.mxu0 0
        %1122 = vmatpush1.bf16.xpose.msra.mxu0 0
        %1123 = vmatprep.subr.bf16.mxu0 0
        %1124 = vmatpush1.bf16.xpose.msra.mxu0 0
        %1125 = vmatprep.subr.bf16.mxu0 0
        %1126 = vmatpush1.bf16.xpose.msra.mxu0 0
        %1127 = vmatprep.subr.bf16.mxu0 0
        %1128 = vmatpush1.bf16.xpose.msra.mxu0 0
        %1129 = vmatprep.subr.bf16.mxu0 0
        %1130 = vmatpush1.bf16.xpose.msra.mxu0 0
        %1131 = vmatprep.subr.bf16.mxu0 0
        %1132 = vmatpush1.bf16.xpose.msra.mxu0 0
        %1133 = vmatprep.subr.bf16.mxu0 0
        %1134 = vmatpush1.bf16.xpose.msra.mxu0 0
        %1135 = vmatprep.subr.bf16.mxu0 0
        %1136 = vmatpush1.bf16.xpose.msra.mxu0 0
        %1137 = vmatprep.mubr.bf16.mxu0 0
        %1138 = vmatmul.mubr.bf16.gmra.mrb[0].mxu0 %v1100
        %v1139 = vpop.f32.mrb[0].mxu0
        %v1140 = vadd.f32 0.0, %v1139
        %v1141 = vpop.f32.mrb[0].mxu0
        %v1142 = vpop.f32.mrb[0].mxu0
        %v1143 = vpop.f32.mrb[0].mxu0
        %1144 = vdwg.mxu0
        %v1146 = vsel %vm1006, %v1001, 0
        %v1149 = vsel %vm1006, %v1005, 0
        %1151 = vmatprep.subr.bf16.mxu0 0
        %1152 = vmatpush1.bf16.xpose.msra.mxu0 %v1149
        %1153 = vmatprep.subr.bf16.mxu0 0
        %1154 = vmatpush1.bf16.xpose.msra.mxu0 0
        %1155 = vmatprep.subr.bf16.mxu0 0
        %1156 = vmatpush1.bf16.xpose.msra.mxu0 0
        %1157 = vmatprep.subr.bf16.mxu0 0
        %1158 = vmatpush1.bf16.xpose.msra.mxu0 0
        %1159 = vmatprep.subr.bf16.mxu0 0
        %1160 = vmatpush1.bf16.xpose.msra.mxu0 0
        %1161 = vmatprep.subr.bf16.mxu0 0
        %1162 = vmatpush1.bf16.xpose.msra.mxu0 0
        %1163 = vmatprep.subr.bf16.mxu0 0
        %1164 = vmatpush1.bf16.xpose.msra.mxu0 0
        %1165 = vmatprep.subr.bf16.mxu0 0
        %1166 = vmatpush1.bf16.xpose.msra.mxu0 0
        %1167 = vmatprep.subr.bf16.mxu0 0
        %1168 = vmatpush1.bf16.xpose.msra.mxu0 0
        %1169 = vmatprep.subr.bf16.mxu0 0
        %1170 = vmatpush1.bf16.xpose.msra.mxu0 0
        %1171 = vmatprep.subr.bf16.mxu0 0
        %1172 = vmatpush1.bf16.xpose.msra.mxu0 0
        %1173 = vmatprep.subr.bf16.mxu0 0
        %1174 = vmatpush1.bf16.xpose.msra.mxu0 0
        %1175 = vmatprep.subr.bf16.mxu0 0
        %1176 = vmatpush1.bf16.xpose.msra.mxu0 0
        %1177 = vmatprep.subr.bf16.mxu0 0
        %1178 = vmatpush1.bf16.xpose.msra.mxu0 0
        %1179 = vmatprep.subr.bf16.mxu0 0
        %1180 = vmatpush1.bf16.xpose.msra.mxu0 0
        %1181 = vmatprep.subr.bf16.mxu0 0
        %1182 = vmatpush1.bf16.xpose.msra.mxu0 0
        %1183 = vmatprep.mubr.bf16.mxu0 0
        %1184 = vmatmul.mubr.bf16.gmra.mrb[0].mxu0 %v1146
        %v1185 = vpop.f32.mrb[0].mxu0
        %v1186 = vadd.f32 0.0, %v1185
        %v1187 = vpop.f32.mrb[0].mxu0
        %v1188 = vpop.f32.mrb[0].mxu0
        %v1189 = vpop.f32.mrb[0].mxu0
        %1190 = vdwg.mxu0
        %v1191 = vlaneseq
        %v1192 = vshrl.u32 %v1191, 7
        %v1193 = vstv %s993
        %v1194 = vadd.s32 %v1192, %v1193
        %v1195 = vlaneseq
        %v1196 = vand.u32 %v1195, 127
        %vm1197 = vcmp.gt.s32.totalorder %v1196, %v1194
        %v1198 = vsel %vm1197, 1, 0
        %vm1199 = vcmp.eq.s32.totalorder %v1198, 1
        %v1200 = vsel %vm1199, -1e+30, %v1048
        %v1201 = vsel %vm1199, -1e+30, %v1094
        %v1202 = vsel %vm1199, -1e+30, %v1140
        %v1203 = vsel %vm1199, -1e+30, %v1186
        %v1204 = vsel %vm1006, %v1200, -inf
        %1205 = vmax.xlane.f32.xlu0 %v1204
        %v1206 = vpop.xlane.xlu0 %1205
        %v1207 = vsel %vm1006, %v1201, -inf
        %1208 = vmax.xlane.f32.xlu0 %v1207
        %v1209 = vpop.xlane.xlu0 %1208
        %v1210 = vsel %vm1006, %v1202, -inf
        %1211 = vmax.xlane.f32.xlu0 %v1210
        %v1212 = vpop.xlane.xlu0 %1211
        %v1213 = vsel %vm1006, %v1203, -inf
        %1214 = vmax.xlane.f32.xlu0 %v1213
        %v1215 = vpop.xlane.xlu0 %1214
        %v1216 = vsub.f32 %v1200, %v1206
        %v1217 = vsub.f32 %v1201, %v1209
        %v1218 = vsub.f32 %v1202, %v1212
        %v1219 = vsub.f32 %v1203, %v1215
        %v1220 = vmul.f32 %v1216, 1.442695
        %v1221 = vpow.pop %v1220
        %v1222 = vmul.f32 %v1217, 1.442695
        %v1223 = vpow.pop %v1222
        %v1224 = vmul.f32 %v1218, 1.442695
        %v1225 = vpow.pop %v1224
        %v1226 = vmul.f32 %v1219, 1.442695
        %v1227 = vpow.pop %v1226
        %v1228 = vsel %vm1006, %v1221, 0.0
        %1229 = vadd.xlane.f32.xlu0 %v1228
        %v1230 = vpop.xlane.xlu0 %1229
        %v1231 = vsel %vm1006, %v1223, 0.0
        %1232 = vadd.xlane.f32.xlu0 %v1231
        %v1233 = vpop.xlane.xlu0 %1232
        %v1234 = vsel %vm1006, %v1225, 0.0
        %1235 = vadd.xlane.f32.xlu0 %v1234
        %v1236 = vpop.xlane.xlu0 %1235
        %v1237 = vsel %vm1006, %v1227, 0.0
        %1238 = vadd.xlane.f32.xlu0 %v1237
        %v1239 = vpop.xlane.xlu0 %1238
        %v1240 = vrcp.pop %v1230
        %v1241 = vrcp.pop %v1233
        %v1242 = vrcp.pop %v1236
        %v1243 = vrcp.pop %v1239
        %v1244 = vmul.f32 %v1221, %v1240
        %v1245 = vmul.f32 %v1223, %v1241
        %v1246 = vmul.f32 %v1225, %v1242
        %v1247 = vmul.f32 %v1227, %v1243
        %v1248 = vpack.c.bf16 %v1244, %v1244
        %v1249 = vpack.c.bf16 %v1245, %v1245
        %v1250 = vpack.c.bf16 %v1246, %v1246
        %v1251 = vpack.c.bf16 %v1247, %v1247
        %v1252 = vld [vmem:[#allocation4] sm:$0xf]
        %v1253 = vld [vmem:[#allocation4 + $0x4] sm:$0xf]
        %v1254 = vld [vmem:[#allocation4 + $0x8] sm:$0xf]
        %v1255 = vld [vmem:[#allocation4 + $0xc] sm:$0xf]
        %v1257 = vsel %vm1006, %v1248, 0
        %vm1259 = vcmask 1043456
        %v1261 = vsel %vm1259, %v1252, 0
        %1263 = vmatprep.subr.bf16.mxu0 0
        %1264 = vmatpush1.bf16.msra.mxu0 %v1261
        %1265 = vmatprep.subr.bf16.mxu0 0
        %1266 = vmatpush1.bf16.msra.mxu0 0
        %1267 = vmatprep.subr.bf16.mxu0 0
        %1268 = vmatpush1.bf16.msra.mxu0 0
        %1269 = vmatprep.subr.bf16.mxu0 0
        %1270 = vmatpush1.bf16.msra.mxu0 0
        %1271 = vmatprep.subr.bf16.mxu0 0
        %1272 = vmatpush1.bf16.msra.mxu0 0
        %1273 = vmatprep.subr.bf16.mxu0 0
        %1274 = vmatpush1.bf16.msra.mxu0 0
        %1275 = vmatprep.subr.bf16.mxu0 0
        %1276 = vmatpush1.bf16.msra.mxu0 0
        %1277 = vmatprep.subr.bf16.mxu0 0
        %1278 = vmatpush1.bf16.msra.mxu0 0
        %1279 = vmatprep.subr.bf16.mxu0 0
        %1280 = vmatpush1.bf16.msra.mxu0 0
        %1281 = vmatprep.subr.bf16.mxu0 0
        %1282 = vmatpush1.bf16.msra.mxu0 0
        %1283 = vmatprep.subr.bf16.mxu0 0
        %1284 = vmatpush1.bf16.msra.mxu0 0
        %1285 = vmatprep.subr.bf16.mxu0 0
        %1286 = vmatpush1.bf16.msra.mxu0 0
        %1287 = vmatprep.subr.bf16.mxu0 0
        %1288 = vmatpush1.bf16.msra.mxu0 0
        %1289 = vmatprep.subr.bf16.mxu0 0
        %1290 = vmatpush1.bf16.msra.mxu0 0
        %1291 = vmatprep.subr.bf16.mxu0 0
        %1292 = vmatpush1.bf16.msra.mxu0 0
        %1293 = vmatprep.subr.bf16.mxu0 0
        %1294 = vmatpush1.bf16.msra.mxu0 0
        %1295 = vmatprep.mubr.bf16.mxu0 0
        %1296 = vmatmul.mubr.bf16.gmra.mrb[0].mxu0 %v1257
        %v1297 = vpop.f32.mrb[0].mxu0
        %v1298 = vadd.f32 0.0, %v1297
        %v1299 = vpop.f32.mrb[0].mxu0
        %v1300 = vpop.f32.mrb[0].mxu0
        %v1301 = vpop.f32.mrb[0].mxu0
        %1302 = vdwg.mxu0
        %v1304 = vsel %vm1006, %v1249, 0
        %v1307 = vsel %vm1259, %v1253, 0
        %1309 = vmatprep.subr.bf16.mxu0 0
        %1310 = vmatpush1.bf16.msra.mxu0 %v1307
        %1311 = vmatprep.subr.bf16.mxu0 0
        %1312 = vmatpush1.bf16.msra.mxu0 0
        %1313 = vmatprep.subr.bf16.mxu0 0
        %1314 = vmatpush1.bf16.msra.mxu0 0
        %1315 = vmatprep.subr.bf16.mxu0 0
        %1316 = vmatpush1.bf16.msra.mxu0 0
        %1317 = vmatprep.subr.bf16.mxu0 0
        %1318 = vmatpush1.bf16.msra.mxu0 0
        %1319 = vmatprep.subr.bf16.mxu0 0
        %1320 = vmatpush1.bf16.msra.mxu0 0
        %1321 = vmatprep.subr.bf16.mxu0 0
        %1322 = vmatpush1.bf16.msra.mxu0 0
        %1323 = vmatprep.subr.bf16.mxu0 0
        %1324 = vmatpush1.bf16.msra.mxu0 0
        %1325 = vmatprep.subr.bf16.mxu0 0
        %1326 = vmatpush1.bf16.msra.mxu0 0
        %1327 = vmatprep.subr.bf16.mxu0 0
        %1328 = vmatpush1.bf16.msra.mxu0 0
        %1329 = vmatprep.subr.bf16.mxu0 0
        %1330 = vmatpush1.bf16.msra.mxu0 0
        %1331 = vmatprep.subr.bf16.mxu0 0
        %1332 = vmatpush1.bf16.msra.mxu0 0
        %1333 = vmatprep.subr.bf16.mxu0 0
        %1334 = vmatpush1.bf16.msra.mxu0 0
        %1335 = vmatprep.subr.bf16.mxu0 0
        %1336 = vmatpush1.bf16.msra.mxu0 0
        %1337 = vmatprep.subr.bf16.mxu0 0
        %1338 = vmatpush1.bf16.msra.mxu0 0
        %1339 = vmatprep.subr.bf16.mxu0 0
        %1340 = vmatpush1.bf16.msra.mxu0 0
        %1341 = vmatprep.mubr.bf16.mxu0 0
        %1342 = vmatmul.mubr.bf16.gmra.mrb[0].mxu0 %v1304
        %v1343 = vpop.f32.mrb[0].mxu0
        %v1344 = vadd.f32 0.0, %v1343
        %v1345 = vpop.f32.mrb[0].mxu0
        %v1346 = vpop.f32.mrb[0].mxu0
        %v1347 = vpop.f32.mrb[0].mxu0
        %1348 = vdwg.mxu0
        %v1350 = vsel %vm1006, %v1250, 0
        %v1353 = vsel %vm1259, %v1254, 0
        %1355 = vmatprep.subr.bf16.mxu0 0
        %1356 = vmatpush1.bf16.msra.mxu0 %v1353
        %1357 = vmatprep.subr.bf16.mxu0 0
        %1358 = vmatpush1.bf16.msra.mxu0 0
        %1359 = vmatprep.subr.bf16.mxu0 0
        %1360 = vmatpush1.bf16.msra.mxu0 0
        %1361 = vmatprep.subr.bf16.mxu0 0
        %1362 = vmatpush1.bf16.msra.mxu0 0
        %1363 = vmatprep.subr.bf16.mxu0 0
        %1364 = vmatpush1.bf16.msra.mxu0 0
        %1365 = vmatprep.subr.bf16.mxu0 0
        %1366 = vmatpush1.bf16.msra.mxu0 0
        %1367 = vmatprep.subr.bf16.mxu0 0
        %1368 = vmatpush1.bf16.msra.mxu0 0
        %1369 = vmatprep.subr.bf16.mxu0 0
        %1370 = vmatpush1.bf16.msra.mxu0 0
        %1371 = vmatprep.subr.bf16.mxu0 0
        %1372 = vmatpush1.bf16.msra.mxu0 0
        %1373 = vmatprep.subr.bf16.mxu0 0
        %1374 = vmatpush1.bf16.msra.mxu0 0
        %1375 = vmatprep.subr.bf16.mxu0 0
        %1376 = vmatpush1.bf16.msra.mxu0 0
        %1377 = vmatprep.subr.bf16.mxu0 0
        %1378 = vmatpush1.bf16.msra.mxu0 0
        %1379 = vmatprep.subr.bf16.mxu0 0
        %1380 = vmatpush1.bf16.msra.mxu0 0
        %1381 = vmatprep.subr.bf16.mxu0 0
        %1382 = vmatpush1.bf16.msra.mxu0 0
        %1383 = vmatprep.subr.bf16.mxu0 0
        %1384 = vmatpush1.bf16.msra.mxu0 0
        %1385 = vmatprep.subr.bf16.mxu0 0
        %1386 = vmatpush1.bf16.msra.mxu0 0
        %1387 = vmatprep.mubr.bf16.mxu0 0
        %1388 = vmatmul.mubr.bf16.gmra.mrb[0].mxu0 %v1350
        %v1389 = vpop.f32.mrb[0].mxu0
        %v1390 = vadd.f32 0.0, %v1389
        %v1391 = vpop.f32.mrb[0].mxu0
        %v1392 = vpop.f32.mrb[0].mxu0
        %v1393 = vpop.f32.mrb[0].mxu0
        %1394 = vdwg.mxu0
        %v1396 = vsel %vm1006, %v1251, 0
        %v1399 = vsel %vm1259, %v1255, 0
        %1401 = vmatprep.subr.bf16.mxu0 0
        %1402 = vmatpush1.bf16.msra.mxu0 %v1399
        %1403 = vmatprep.subr.bf16.mxu0 0
        %1404 = vmatpush1.bf16.msra.mxu0 0
        %1405 = vmatprep.subr.bf16.mxu0 0
        %1406 = vmatpush1.bf16.msra.mxu0 0
        %1407 = vmatprep.subr.bf16.mxu0 0
        %1408 = vmatpush1.bf16.msra.mxu0 0
        %1409 = vmatprep.subr.bf16.mxu0 0
        %1410 = vmatpush1.bf16.msra.mxu0 0
        %1411 = vmatprep.subr.bf16.mxu0 0
        %1412 = vmatpush1.bf16.msra.mxu0 0
        %1413 = vmatprep.subr.bf16.mxu0 0
        %1414 = vmatpush1.bf16.msra.mxu0 0
        %1415 = vmatprep.subr.bf16.mxu0 0
        %1416 = vmatpush1.bf16.msra.mxu0 0
        %1417 = vmatprep.subr.bf16.mxu0 0
        %1418 = vmatpush1.bf16.msra.mxu0 0
        %1419 = vmatprep.subr.bf16.mxu0 0
        %1420 = vmatpush1.bf16.msra.mxu0 0
        %1421 = vmatprep.subr.bf16.mxu0 0
        %1422 = vmatpush1.bf16.msra.mxu0 0
        %1423 = vmatprep.subr.bf16.mxu0 0
        %1424 = vmatpush1.bf16.msra.mxu0 0
        %1425 = vmatprep.subr.bf16.mxu0 0
        %1426 = vmatpush1.bf16.msra.mxu0 0
        %1427 = vmatprep.subr.bf16.mxu0 0
        %1428 = vmatpush1.bf16.msra.mxu0 0
        %1429 = vmatprep.subr.bf16.mxu0 0
        %1430 = vmatpush1.bf16.msra.mxu0 0
        %1431 = vmatprep.subr.bf16.mxu0 0
        %1432 = vmatpush1.bf16.msra.mxu0 0
        %1433 = vmatprep.mubr.bf16.mxu0 0
        %1434 = vmatmul.mubr.bf16.gmra.mrb[0].mxu0 %v1396
        %v1435 = vpop.f32.mrb[0].mxu0
        %v1436 = vadd.f32 0.0, %v1435
        %v1437 = vpop.f32.mrb[0].mxu0
        %v1438 = vpop.f32.mrb[0].mxu0
        %v1439 = vpop.f32.mrb[0].mxu0
        %1440 = vdwg.mxu0
        %v1441 = vpack.c.bf16 %v1298, %v1298
        %v1442 = vpack.c.bf16 %v1344, %v1344
        %v1443 = vpack.c.bf16 %v1390, %v1390
        %v1444 = vpack.c.bf16 %v1436, %v1436
        %v1445 = vld [vmem:[%s10] sm:$0xf]
        %v1446 = vld [vmem:[%s10 + $0x4] sm:$0xf]
        %v1447 = vld [vmem:[%s10 + $0x8] sm:$0xf]
        %v1448 = vld [vmem:[%s10 + $0xc] sm:$0xf]
        %v1450 = vsel %vm1006, %v1441, 0
        %v1453 = vsel %vm1259, %v1445, 0
        %1455 = vmatprep.subr.bf16.mxu0 0
        %1456 = vmatpush1.bf16.msra.mxu0 %v1453
        %1457 = vmatprep.subr.bf16.mxu0 0
        %1458 = vmatpush1.bf16.msra.mxu0 0
        %1459 = vmatprep.subr.bf16.mxu0 0
        %1460 = vmatpush1.bf16.msra.mxu0 0
        %1461 = vmatprep.subr.bf16.mxu0 0
        %1462 = vmatpush1.bf16.msra.mxu0 0
        %1463 = vmatprep.subr.bf16.mxu0 0
        %1464 = vmatpush1.bf16.msra.mxu0 0
        %1465 = vmatprep.subr.bf16.mxu0 0
        %1466 = vmatpush1.bf16.msra.mxu0 0
        %1467 = vmatprep.subr.bf16.mxu0 0
        %1468 = vmatpush1.bf16.msra.mxu0 0
        %1469 = vmatprep.subr.bf16.mxu0 0
        %1470 = vmatpush1.bf16.msra.mxu0 0
        %1471 = vmatprep.subr.bf16.mxu0 0
        %1472 = vmatpush1.bf16.msra.mxu0 0
        %1473 = vmatprep.subr.bf16.mxu0 0
        %1474 = vmatpush1.bf16.msra.mxu0 0
        %1475 = vmatprep.subr.bf16.mxu0 0
        %1476 = vmatpush1.bf16.msra.mxu0 0
        %1477 = vmatprep.subr.bf16.mxu0 0
        %1478 = vmatpush1.bf16.msra.mxu0 0
        %1479 = vmatprep.subr.bf16.mxu0 0
        %1480 = vmatpush1.bf16.msra.mxu0 0
        %1481 = vmatprep.subr.bf16.mxu0 0
        %1482 = vmatpush1.bf16.msra.mxu0 0
        %1483 = vmatprep.subr.bf16.mxu0 0
        %1484 = vmatpush1.bf16.msra.mxu0 0
        %1485 = vmatprep.subr.bf16.mxu0 0
        %1486 = vmatpush1.bf16.msra.mxu0 0
        %1487 = vmatprep.mubr.bf16.mxu0 0
        %1488 = vmatmul.mubr.bf16.gmra.mrb[0].mxu0 %v1450
        %v1489 = vpop.f32.mrb[0].mxu0
        %v1490 = vadd.f32 0.0, %v1489
        %v1491 = vpop.f32.mrb[0].mxu0
        %v1492 = vpop.f32.mrb[0].mxu0
        %v1493 = vpop.f32.mrb[0].mxu0
        %1494 = vdwg.mxu0
        %v1496 = vsel %vm1006, %v1442, 0
        %v1499 = vsel %vm1259, %v1446, 0
        %1501 = vmatprep.subr.bf16.mxu0 0
        %1502 = vmatpush1.bf16.msra.mxu0 %v1499
        %1503 = vmatprep.subr.bf16.mxu0 0
        %1504 = vmatpush1.bf16.msra.mxu0 0
        %1505 = vmatprep.subr.bf16.mxu0 0
        %1506 = vmatpush1.bf16.msra.mxu0 0
        %1507 = vmatprep.subr.bf16.mxu0 0
        %1508 = vmatpush1.bf16.msra.mxu0 0
        %1509 = vmatprep.subr.bf16.mxu0 0
        %1510 = vmatpush1.bf16.msra.mxu0 0
        %1511 = vmatprep.subr.bf16.mxu0 0
        %1512 = vmatpush1.bf16.msra.mxu0 0
        %1513 = vmatprep.subr.bf16.mxu0 0
        %1514 = vmatpush1.bf16.msra.mxu0 0
        %1515 = vmatprep.subr.bf16.mxu0 0
        %1516 = vmatpush1.bf16.msra.mxu0 0
        %1517 = vmatprep.subr.bf16.mxu0 0
        %1518 = vmatpush1.bf16.msra.mxu0 0
        %1519 = vmatprep.subr.bf16.mxu0 0
        %1520 = vmatpush1.bf16.msra.mxu0 0
        %1521 = vmatprep.subr.bf16.mxu0 0
        %1522 = vmatpush1.bf16.msra.mxu0 0
        %1523 = vmatprep.subr.bf16.mxu0 0
        %1524 = vmatpush1.bf16.msra.mxu0 0
        %1525 = vmatprep.subr.bf16.mxu0 0
        %1526 = vmatpush1.bf16.msra.mxu0 0
        %1527 = vmatprep.subr.bf16.mxu0 0
        %1528 = vmatpush1.bf16.msra.mxu0 0
        %1529 = vmatprep.subr.bf16.mxu0 0
        %1530 = vmatpush1.bf16.msra.mxu0 0
        %1531 = vmatprep.subr.bf16.mxu0 0
        %1532 = vmatpush1.bf16.msra.mxu0 0
        %1533 = vmatprep.mubr.bf16.mxu0 0
        %1534 = vmatmul.mubr.bf16.gmra.mrb[0].mxu0 %v1496
        %v1535 = vpop.f32.mrb[0].mxu0
        %v1536 = vadd.f32 0.0, %v1535
        %v1537 = vpop.f32.mrb[0].mxu0
        %v1538 = vpop.f32.mrb[0].mxu0
        %v1539 = vpop.f32.mrb[0].mxu0
        %1540 = vdwg.mxu0
        %v1542 = vsel %vm1006, %v1443, 0
        %v1545 = vsel %vm1259, %v1447, 0
        %1547 = vmatprep.subr.bf16.mxu0 0
        %1548 = vmatpush1.bf16.msra.mxu0 %v1545
        %1549 = vmatprep.subr.bf16.mxu0 0
        %1550 = vmatpush1.bf16.msra.mxu0 0
        %1551 = vmatprep.subr.bf16.mxu0 0
        %1552 = vmatpush1.bf16.msra.mxu0 0
        %1553 = vmatprep.subr.bf16.mxu0 0
        %1554 = vmatpush1.bf16.msra.mxu0 0
        %1555 = vmatprep.subr.bf16.mxu0 0
        %1556 = vmatpush1.bf16.msra.mxu0 0
        %1557 = vmatprep.subr.bf16.mxu0 0
        %1558 = vmatpush1.bf16.msra.mxu0 0
        %1559 = vmatprep.subr.bf16.mxu0 0
        %1560 = vmatpush1.bf16.msra.mxu0 0
        %1561 = vmatprep.subr.bf16.mxu0 0
        %1562 = vmatpush1.bf16.msra.mxu0 0
        %1563 = vmatprep.subr.bf16.mxu0 0
        %1564 = vmatpush1.bf16.msra.mxu0 0
        %1565 = vmatprep.subr.bf16.mxu0 0
        %1566 = vmatpush1.bf16.msra.mxu0 0
        %1567 = vmatprep.subr.bf16.mxu0 0
        %1568 = vmatpush1.bf16.msra.mxu0 0
        %1569 = vmatprep.subr.bf16.mxu0 0
        %1570 = vmatpush1.bf16.msra.mxu0 0
        %1571 = vmatprep.subr.bf16.mxu0 0
        %1572 = vmatpush1.bf16.msra.mxu0 0
        %1573 = vmatprep.subr.bf16.mxu0 0
        %1574 = vmatpush1.bf16.msra.mxu0 0
        %1575 = vmatprep.subr.bf16.mxu0 0
        %1576 = vmatpush1.bf16.msra.mxu0 0
        %1577 = vmatprep.subr.bf16.mxu0 0
        %1578 = vmatpush1.bf16.msra.mxu0 0
        %1579 = vmatprep.mubr.bf16.mxu0 0
        %1580 = vmatmul.mubr.bf16.gmra.mrb[0].mxu0 %v1542
        %v1581 = vpop.f32.mrb[0].mxu0
        %v1582 = vadd.f32 0.0, %v1581
        %v1583 = vpop.f32.mrb[0].mxu0
        %v1584 = vpop.f32.mrb[0].mxu0
        %v1585 = vpop.f32.mrb[0].mxu0
        %1586 = vdwg.mxu0
        %v1588 = vsel %vm1006, %v1444, 0
        %v1591 = vsel %vm1259, %v1448, 0
        %1593 = vmatprep.subr.bf16.mxu0 0
        %1594 = vmatpush1.bf16.msra.mxu0 %v1591
        %1595 = vmatprep.subr.bf16.mxu0 0
        %1596 = vmatpush1.bf16.msra.mxu0 0
        %1597 = vmatprep.subr.bf16.mxu0 0
        %1598 = vmatpush1.bf16.msra.mxu0 0
        %1599 = vmatprep.subr.bf16.mxu0 0
        %1600 = vmatpush1.bf16.msra.mxu0 0
        %1601 = vmatprep.subr.bf16.mxu0 0
        %1602 = vmatpush1.bf16.msra.mxu0 0
        %1603 = vmatprep.subr.bf16.mxu0 0
        %1604 = vmatpush1.bf16.msra.mxu0 0
        %1605 = vmatprep.subr.bf16.mxu0 0
        %1606 = vmatpush1.bf16.msra.mxu0 0
        %1607 = vmatprep.subr.bf16.mxu0 0
        %1608 = vmatpush1.bf16.msra.mxu0 0
        %1609 = vmatprep.subr.bf16.mxu0 0
        %1610 = vmatpush1.bf16.msra.mxu0 0
        %1611 = vmatprep.subr.bf16.mxu0 0
        %1612 = vmatpush1.bf16.msra.mxu0 0
        %1613 = vmatprep.subr.bf16.mxu0 0
        %1614 = vmatpush1.bf16.msra.mxu0 0
        %1615 = vmatprep.subr.bf16.mxu0 0
        %1616 = vmatpush1.bf16.msra.mxu0 0
        %1617 = vmatprep.subr.bf16.mxu0 0
        %1618 = vmatpush1.bf16.msra.mxu0 0
        %1619 = vmatprep.subr.bf16.mxu0 0
        %1620 = vmatpush1.bf16.msra.mxu0 0
        %1621 = vmatprep.subr.bf16.mxu0 0
        %1622 = vmatpush1.bf16.msra.mxu0 0
        %1623 = vmatprep.subr.bf16.mxu0 0
        %1624 = vmatpush1.bf16.msra.mxu0 0
        %1625 = vmatprep.mubr.bf16.mxu0 0
        %1626 = vmatmul.mubr.bf16.gmra.mrb[0].mxu0 %v1588
        %v1627 = vpop.f32.mrb[0].mxu0
        %v1628 = vadd.f32 0.0, %v1627
        %v1629 = vpop.f32.mrb[0].mxu0
        %v1630 = vpop.f32.mrb[0].mxu0
        %v1631 = vpop.f32.mrb[0].mxu0
        %1632 = vdwg.mxu0
        %vm1633 = vcmask 261120
        %v1634 = vsel %vm1633, %v1490, 0.0
        %v1635 = vsel %vm1633, %v1536, 0.0
        %v1636 = vadd.f32 %v1634, %v1635
        %v1637 = vsel %vm1633, %v1582, 0.0
        %v1638 = vadd.f32 %v1636, %v1637
        %v1639 = vsel %vm1633, %v1628, 0.0
        %v1640 = vadd.f32 %v1638, %v1639
        %v1641 = vld [vmem:[#allocation13] sm:$0x1]
        %v1643 = vlaneseq
        %v1644 = vshrl.u32 %v1643, 7
        %v1645 = vsub.s32 0, %v1644
        %v1646 = vrot.slane %v1641, %v1645
        %v1648 = vadd.f32 %v1640, %v1646
        %v1649 = vadd.f32 %v1648, %v992
        %v1650 = vld [vmem:[#allocation14] sm:$0x1]
        %v1651 = vld [vmem:[#allocation16] sm:$0x1]
        %v1652 = vsel %vm1633, %v1649, 0.0
        %1653 = vadd.xlane.f32.xlu0 %v1652
        %v1654 = vpop.xlane.xlu0 %1653
        %v1655 = vrcp.pop 32.0
        %v1656 = vmul.f32 %v1654, %v1655
        %v1657 = vsub.f32 %v1649, %v1656
        %v1658 = vmul.f32 %v1657, %v1657
        %v1659 = vsel %vm1633, %v1658, 0.0
        %1660 = vadd.xlane.f32.xlu0 %v1659
        %v1661 = vpop.xlane.xlu0 %1660
        %v1662 = vmul.f32 %v1661, %v1655
        %v1663 = vadd.f32 %v1662, 1e-05
        %v1664 = vrsqrt.pop %v1663
        %v1665 = vmul.f32 %v1657, %v1664
        %v1667 = vlaneseq
        %v1668 = vshrl.u32 %v1667, 7
        %v1669 = vsub.s32 0, %v1668
        %v1670 = vrot.slane %v1650, %v1669
        %v1672 = vmul.f32 %v1665, %v1670
        %v1674 = vlaneseq
        %v1675 = vshrl.u32 %v1674, 7
        %v1676 = vsub.s32 0, %v1675
        %v1677 = vrot.slane %v1651, %v1676
        %v1679 = vadd.f32 %v1672, %v1677
        %v1680 = vpack.c.bf16 %v1679, %v1679
        %v1681 = vld [vmem:[%s14] sm:$0xf]
        %v1682 = vld [vmem:[%s14 + $0x4] sm:$0xf]
        %v1683 = vld [vmem:[%s14 + $0x8] sm:$0xf]
        %v1684 = vld [vmem:[%s14 + $0xc] sm:$0xf]
        %v1685 = vld [vmem:[%s15] sm:$0x1]
        %v1687 = vlaneseq
        %v1688 = vshrl.u32 %v1687, 7
        %v1689 = vsub.s32 0, %v1688
        %v1690 = vrot.slane %v1685, %v1689
        %v1696 = vunpack.c.l.b16 %v1681
        %v1697 = vunpack.c.l.b16 %v1682
        %v1698 = vunpack.c.l.b16 %v1683
        %v1699 = vunpack.c.l.b16 %v1684
        %v1700 = vpack.c.b16 %v1697, %v1696
        %v1701 = vpack.c.b16 %v1699, %v1698
        %v1705 = vsel %vm1633, %v1680, 0
        %1707 = vmatprep.subr.bf16.mxu0 0
        %1708 = vmatpush1.bf16.msra.mxu0 %v1700
        %1709 = vmatprep.subr.bf16.mxu0 0
        %1710 = vmatpush1.bf16.msra.mxu0 %v1701
        %1711 = vmatprep.subr.bf16.mxu0 0
        %1712 = vmatpush1.bf16.msra.mxu0 0
        %1713 = vmatprep.subr.bf16.mxu0 0
        %1714 = vmatpush1.bf16.msra.mxu0 0
        %1715 = vmatprep.subr.bf16.mxu0 0
        %1716 = vmatpush1.bf16.msra.mxu0 0
        %1717 = vmatprep.subr.bf16.mxu0 0
        %1718 = vmatpush1.bf16.msra.mxu0 0
        %1719 = vmatprep.subr.bf16.mxu0 0
        %1720 = vmatpush1.bf16.msra.mxu0 0
        %1721 = vmatprep.subr.bf16.mxu0 0
        %1722 = vmatpush1.bf16.msra.mxu0 0
        %1723 = vmatprep.subr.bf16.mxu0 0
        %1724 = vmatpush1.bf16.msra.mxu0 0
        %1725 = vmatprep.subr.bf16.mxu0 0
        %1726 = vmatpush1.bf16.msra.mxu0 0
        %1727 = vmatprep.subr.bf16.mxu0 0
        %1728 = vmatpush1.bf16.msra.mxu0 0
        %1729 = vmatprep.subr.bf16.mxu0 0
        %1730 = vmatpush1.bf16.msra.mxu0 0
        %1731 = vmatprep.subr.bf16.mxu0 0
        %1732 = vmatpush1.bf16.msra.mxu0 0
        %1733 = vmatprep.subr.bf16.mxu0 0
        %1734 = vmatpush1.bf16.msra.mxu0 0
        %1735 = vmatprep.subr.bf16.mxu0 0
        %1736 = vmatpush1.bf16.msra.mxu0 0
        %1737 = vmatprep.subr.bf16.mxu0 0
        %1738 = vmatpush1.bf16.msra.mxu0 0
        %1739 = vmatprep.mubr.bf16.mxu0 0
        %1740 = vmatmul.mubr.bf16.gmra.mrb[0].mxu0 %v1705
        %v1741 = vpop.f32.mrb[0].mxu0
        %v1742 = vadd.f32 %v1690, %v1741
        %v1743 = vpop.f32.mrb[0].mxu0
        %v1744 = vpop.f32.mrb[0].mxu0
        %v1745 = vpop.f32.mrb[0].mxu0
        %1746 = vdwg.mxu0
        %v1747 = vmul.f32 %v1742, 1.702
        %v1748 = vxor.u32 %v1747, 2147483648
        %v1749 = vmul.f32 %v1748, 1.442695
        %v1750 = vpow.pop %v1749
        %v1751 = vadd.f32 %v1750, 1.0
        %v1752 = vrcp.pop %v1751
        %v1753 = vmul.f32 1.0, %v1752
        %v1754 = vmul.f32 %v1742, %v1753
        %v1755 = vpack.c.bf16 %v1754, %v1754
        %v1756 = vld [vmem:[%s16] sm:$0xf]
        %v1757 = vld [vmem:[%s16 + $0x4] sm:$0xf]
        %v1758 = vld [vmem:[%s16 + $0x8] sm:$0xf]
        %v1759 = vld [vmem:[%s16 + $0xc] sm:$0xf]
        %v1760 = vld [vmem:[%s16 + $0x10] sm:$0xf]
        %v1761 = vld [vmem:[%s16 + $0x14] sm:$0xf]
        %v1762 = vld [vmem:[%s16 + $0x18] sm:$0xf]
        %v1763 = vld [vmem:[%s16 + $0x1c] sm:$0xf]
        %v1764 = vld [vmem:[%s16 + $0x20] sm:$0xf]
        %v1765 = vld [vmem:[%s16 + $0x24] sm:$0xf]
        %v1766 = vld [vmem:[%s16 + $0x28] sm:$0xf]
        %v1767 = vld [vmem:[%s16 + $0x2c] sm:$0xf]
        %v1768 = vld [vmem:[%s16 + $0x30] sm:$0xf]
        %v1769 = vld [vmem:[%s16 + $0x34] sm:$0xf]
        %v1770 = vld [vmem:[%s16 + $0x38] sm:$0xf]
        %v1771 = vld [vmem:[%s16 + $0x3c] sm:$0xf]
        %v1772 = vld [vmem:[%s17] sm:$0x1]
        %v1774 = vlaneseq
        %v1775 = vshrl.u32 %v1774, 7
        %v1776 = vsub.s32 0, %v1775
        %v1777 = vrot.slane %v1772, %v1776
        %v1795 = vunpack.c.l.b16 %v1756
        %v1796 = vunpack.c.l.b16 %v1757
        %v1797 = vunpack.c.l.b16 %v1758
        %v1798 = vunpack.c.l.b16 %v1759
        %v1799 = vunpack.c.l.b16 %v1760
        %v1800 = vunpack.c.l.b16 %v1761
        %v1801 = vunpack.c.l.b16 %v1762
        %v1802 = vunpack.c.l.b16 %v1763
        %v1803 = vunpack.c.l.b16 %v1764
        %v1804 = vunpack.c.l.b16 %v1765
        %v1805 = vunpack.c.l.b16 %v1766
        %v1806 = vunpack.c.l.b16 %v1767
        %v1807 = vunpack.c.l.b16 %v1768
        %v1808 = vunpack.c.l.b16 %v1769
        %v1809 = vunpack.c.l.b16 %v1770
        %v1810 = vunpack.c.l.b16 %v1771
        %v1811 = vpack.c.b16 %v1796, %v1795
        %v1812 = vpack.c.b16 %v1798, %v1797
        %v1813 = vpack.c.b16 %v1800, %v1799
        %v1814 = vpack.c.b16 %v1802, %v1801
        %v1815 = vpack.c.b16 %v1804, %v1803
        %v1816 = vpack.c.b16 %v1806, %v1805
        %v1817 = vpack.c.b16 %v1808, %v1807
        %v1818 = vpack.c.b16 %v1810, %v1809
        %1827 = vmatprep.subr.bf16.mxu0 0
        %1828 = vmatpush1.bf16.msra.mxu0 %v1811
        %1829 = vmatprep.subr.bf16.mxu0 0
        %1830 = vmatpush1.bf16.msra.mxu0 %v1812
        %1831 = vmatprep.subr.bf16.mxu0 0
        %1832 = vmatpush1.bf16.msra.mxu0 %v1813
        %1833 = vmatprep.subr.bf16.mxu0 0
        %1834 = vmatpush1.bf16.msra.mxu0 %v1814
        %1835 = vmatprep.subr.bf16.mxu0 0
        %1836 = vmatpush1.bf16.msra.mxu0 %v1815
        %1837 = vmatprep.subr.bf16.mxu0 0
        %1838 = vmatpush1.bf16.msra.mxu0 %v1816
        %1839 = vmatprep.subr.bf16.mxu0 0
        %1840 = vmatpush1.bf16.msra.mxu0 %v1817
        %1841 = vmatprep.subr.bf16.mxu0 0
        %1842 = vmatpush1.bf16.msra.mxu0 %v1818
        %1843 = vmatprep.subr.bf16.mxu0 0
        %1844 = vmatpush1.bf16.msra.mxu0 0
        %1845 = vmatprep.subr.bf16.mxu0 0
        %1846 = vmatpush1.bf16.msra.mxu0 0
        %1847 = vmatprep.subr.bf16.mxu0 0
        %1848 = vmatpush1.bf16.msra.mxu0 0
        %1849 = vmatprep.subr.bf16.mxu0 0
        %1850 = vmatpush1.bf16.msra.mxu0 0
        %1851 = vmatprep.subr.bf16.mxu0 0
        %1852 = vmatpush1.bf16.msra.mxu0 0
        %1853 = vmatprep.subr.bf16.mxu0 0
        %1854 = vmatpush1.bf16.msra.mxu0 0
        %1855 = vmatprep.subr.bf16.mxu0 0
        %1856 = vmatpush1.bf16.msra.mxu0 0
        %1857 = vmatprep.subr.bf16.mxu0 0
        %1858 = vmatpush1.bf16.msra.mxu0 0
        %1859 = vmatprep.mubr.bf16.mxu0 0
        %1860 = vmatmul.mubr.bf16.gmra.mrb[0].mxu0 %v1755
        %v1861 = vpop.f32.mrb[0].mxu0
        %v1862 = vadd.f32 %v1777, %v1861
        %v1863 = vpop.f32.mrb[0].mxu0
        %v1864 = vpop.f32.mrb[0].mxu0
        %v1865 = vpop.f32.mrb[0].mxu0
        %1866 = vdwg.mxu0
        %v1867 = vadd.f32 %v1862, %v1649
        %1868 = vst.msk [vmem:[%s689] sm:$0xff] %vm1633, %v1867
        %s1869 = sand.u32 %s448, 1
        %s1870 = scalar_lea.sflag [#allocation7], %s1869
        %s1871 = sand.u32 %s448, 1
        %s1872 = smul.addr %s1871, 8
        %s1873 = scalar_lea.vmem [#allocation17], %s1872
        // Predicated region
        $region125: #{tpu_custom_call.1} parent=91 // pred_check
          %p1874 = pneg %p458
        $region126: #{tpu_custom_call.1} parent=91 // pred_check_branch
          %1876 = sbr.rel (%p1874) target = $region128
        $region127: #{tpu_custom_call.1} parent=91 // pred_region
          %s1878 = ssub.s32 128, 128
          %1879 = vsyncadd %s1870, %s1878
          %s1880 = sadd.s32 %s41, %s40
          %s1881 = smul.addr %s1880, 128
          %s1882 = scalar_lea.hbm %s18, %s1881
          %s1884 = sshll.u32 %s1873, 4
          %s1885 = int_to_ptr.vmem [resolvable:$true] %s1884
          %1887 = dma.vmem_to_hbm [thread:$0]  %s1885, 128, %s1882, %s1870
        $region128: #{tpu_custom_call.1} parent=91 // pred_fallthru
          _
      $region92: #{tpu_custom_call.1} parent=5 // pred_fallthru
        _
      %p1888 = scmp.le.s32.totalorder 2, %s31
      // Predicated region
      $region129: #{tpu_custom_call.1} parent=5 // pred_check
        %p1889 = pneg %p1888
      $region130: #{tpu_custom_call.1} parent=5 // pred_check_branch
        %1891 = sbr.rel (%p1889) target = $region132
      $region131: #{tpu_custom_call.1} parent=5 // pred_region
        %s1892 = ssub.s32 %s31, 2
        // Predicated region
        $region133: #{tpu_custom_call.1} parent=131 // pred_check
          %p1893 = pneg %p464
        $region134: #{tpu_custom_call.1} parent=131 // pred_check_branch
          %1895 = sbr.rel (%p1893) target = $region136
        $region135: #{tpu_custom_call.1} parent=131 // pred_region
          %s1896 = sand.u32 %s449, 1
          %s1897 = scalar_lea.sflag [#allocation7], %s1896
          %s1898 = sand.u32 %s449, 1
          %s1899 = smul.addr %s1898, 8
          %s1900 = scalar_lea.vmem [#allocation17], %s1899
          %1901 = dma.done %s1897, 128
        $region136: #{tpu_custom_call.1} parent=131 // pred_fallthru
          _
      $region132: #{tpu_custom_call.1} parent=5 // pred_fallthru
        _
    $region6: #{tpu_custom_call.1} parent=1 // loop_footer
      %s35 = sadd.s32 1, %s31
    $region7: #{tpu_custom_call.1} parent=1 // loop_footer_branch
      %30 = sbr.rel target = $region3
    $region8: #{tpu_custom_call.1} parent=1 // loop_exit
      _
    %1902 = vsyncpa [#allocation6], 1
    %s1903 = scalar_lea.sflag [#allocation6], 1
    %1904 = vsyncpa %s1903, 1
    %1905 = vsyncpa [#allocation9], 1
    %1906 = vsyncpa [#allocation12], 1
    %1907 = vsyncpa [#allocation15], 1
    %1908 = vsyncpa [#allocation7], 1
    %s1909 = scalar_lea.sflag [#allocation7], 1
    %1910 = vsyncpa %s1909, 1

</llo_original>
